<compile_context>
chip_gen: v7x
topology: tpu7x:2x2x1
jax: 0.10.0
libtpu: 0.0.40
codegen_flags: <defaults>
</compile_context>

<pallas_src>
import functools

import jax
import jax.numpy as jnp
from jax.experimental import pallas as pl
from jax.experimental.pallas import tpu as pltpu


# ----------------------------------------------------------------------------
# Small helpers
# ----------------------------------------------------------------------------
def _round_up(x, m):
    return ((x + m - 1) // m) * m


def _pad2d(a, rows, cols):
    return jnp.pad(a, ((0, rows - a.shape[0]), (0, cols - a.shape[1])))


def _pick_tile(n_pad, cap):
    """Largest tile in {128,256,512,1024} that divides n_pad and is <= cap."""
    t = 128
    for cand in (256, 512, 1024):
        if cand <= cap and n_pad % cand == 0:
            t = cand
    return t


# ----------------------------------------------------------------------------
# Pallas kernels
# ----------------------------------------------------------------------------
def _project_kernel(x_ref, wl_ref, wr_ref, b_ref, xw_ref, root_ref):
    """Row-parallel per-layer projection (hoisted out of the N^2 loop):

        XW[i]   = X[i] @ W_l                    (bf16, aggregation operand)
        ROOT[i] = X[i] @ W_r + b                (f32, accumulator seed)
    """
    x = x_ref[...]
    xw_ref[...] = jnp.dot(x, wl_ref[...],
                          preferred_element_type=jnp.float32).astype(xw_ref.dtype)
    root = jnp.dot(x, wr_ref[...], preferred_element_type=jnp.float32)
    root_ref[...] = (root + b_ref[...]).astype(root_ref.dtype)


def _aggregate_kernel(a_ref, xw_ref, root_ref, *refs, apply_relu, want_pre):
    """Fused SAGEConv aggregation tile:

        acc(i) @ k==0     = ROOT[i]                 (= X[i] @ W_r + b)
        acc(i)            += A[i, k] @ XW[k]        (k = contraction tiles)
        out(i) @ k==last  = relu(acc) / acc         (pure cast + store)
    """
    if want_pre:
        out_ref, pre_ref, acc_ref = refs
    else:
        out_ref, acc_ref = refs
        pre_ref = None

    k = pl.program_id(1)
    nk = pl.num_programs(1)

    @pl.when(k == 0)
    def _init():
        acc_ref[...] = root_ref[...]

    acc_ref[...] += jnp.dot(a_ref[...], xw_ref[...],
                            preferred_element_type=jnp.float32)

    @pl.when(k == nk - 1)
    def _store():
        pre = acc_ref[...]
        if want_pre:
            pre_ref[...] = pre.astype(pre_ref.dtype)
        if apply_relu:
            out_ref[...] = jnp.maximum(pre, 0.0).astype(out_ref.dtype)
        else:
            out_ref[...] = pre.astype(out_ref.dtype)


def _scatter_mean_kernel(s_ref, x_ref, o_ref):
    """g += S[:, k] @ X[k]  (output block resident across the k axis)."""
    k = pl.program_id(0)

    @pl.when(k == 0)
    def _init():
        o_ref[...] = jnp.zeros_like(o_ref)

    o_ref[...] += jnp.dot(s_ref[...], x_ref[...],
                          preferred_element_type=jnp.float32)


# ----------------------------------------------------------------------------
# Wrappers around pallas_call
# ----------------------------------------------------------------------------
def sage_project(x_p, w_l, w_r, b_l, f_out_pad):
    """Compute XW = X@Wl (bf16) and ROOT = X@Wr + b (f32) on padded inputs."""
    n_pad, f_in_pad = x_p.shape
    wl_p = _pad2d(w_l.astype(jnp.bfloat16), f_in_pad, f_out_pad)
    wr_p = _pad2d(w_r.astype(jnp.bfloat16), f_in_pad, f_out_pad)
    bl_p = jnp.pad(b_l.astype(jnp.float32),
                   (0, f_out_pad - b_l.shape[0])).reshape(1, f_out_pad)

    tm = _pick_tile(n_pad, 512)

    xw, root = pl.pallas_call(
        _project_kernel,
        out_shape=(jax.ShapeDtypeStruct((n_pad, f_out_pad), jnp.bfloat16),
                   jax.ShapeDtypeStruct((n_pad, f_out_pad), jnp.float32)),
        grid_spec=pltpu.PrefetchScalarGridSpec(
            num_scalar_prefetch=0,
            grid=(n_pad // tm,),
            in_specs=[
                pl.BlockSpec((tm, f_in_pad), lambda i: (i, 0)),        # X rows
                pl.BlockSpec((f_in_pad, f_out_pad), lambda i: (0, 0)),  # W_l
                pl.BlockSpec((f_in_pad, f_out_pad), lambda i: (0, 0)),  # W_r
                pl.BlockSpec((1, f_out_pad), lambda i: (0, 0)),         # bias
            ],
            out_specs=(pl.BlockSpec((tm, f_out_pad), lambda i: (i, 0)),
                       pl.BlockSpec((tm, f_out_pad), lambda i: (i, 0)))),
        compiler_params=pltpu.CompilerParams(
            dimension_semantics=("parallel",)),
    )(x_p, wl_p, wr_p, bl_p)
    return xw, root


def sage_aggregate(a_p, xw, root, *, apply_relu, want_pre, out_dtype):
    """acc = ROOT + A_norm @ XW over a 2-D (row tile, contraction tile) grid."""
    n_pad = a_p.shape[0]
    f_out_pad = xw.shape[1]

    tm_cap = 512
    if n_pad >= 256:
        tm_cap = min(tm_cap, n_pad // 2)   # keep >=2 row tiles for megacore
    tm = _pick_tile(n_pad, tm_cap)
    tk = _pick_tile(n_pad, 1024)
    grid = (n_pad // tm, n_pad // tk)

    out_shapes = [jax.ShapeDtypeStruct((n_pad, f_out_pad), out_dtype)]
    out_specs = [pl.BlockSpec((tm, f_out_pad), lambda i, k: (i, 0))]
    if want_pre:
        out_shapes.append(jax.ShapeDtypeStruct((n_pad, f_out_pad), jnp.bfloat16))
        out_specs.append(pl.BlockSpec((tm, f_out_pad), lambda i, k: (i, 0)))

    kernel = functools.partial(_aggregate_kernel,
                               apply_relu=apply_relu, want_pre=want_pre)

    outs = pl.pallas_call(
        kernel,
        out_shape=tuple(out_shapes),
        grid_spec=pltpu.PrefetchScalarGridSpec(
            num_scalar_prefetch=0,
            grid=grid,
            in_specs=[
                pl.BlockSpec((tm, tk), lambda i, k: (i, k)),           # A tile
                pl.BlockSpec((tk, f_out_pad), lambda i, k: (k, 0)),    # XW tile
                pl.BlockSpec((tm, f_out_pad), lambda i, k: (i, 0)),    # ROOT rows
            ],
            out_specs=tuple(out_specs),
            scratch_shapes=[pltpu.VMEM((tm, f_out_pad), jnp.float32)]),
        compiler_params=pltpu.CompilerParams(
            dimension_semantics=("parallel", "arbitrary")),
    )(a_p, xw, root)

    if want_pre:
        return outs[0], outs[1]
    return outs[0]


def scatter_mean(s_mean, h_p, num_clusters, num_feats):
    """g[c] = mean of h rows assigned to cluster c (S is row-normalized)."""
    c, n = s_mean.shape
    n_pad, f_pad = h_p.shape
    c_pad = _round_up(max(c, 16), 16)          # bf16 sublane packing
    s_p = _pad2d(s_mean.astype(jnp.bfloat16), c_pad, n_pad)
    tk = _pick_tile(n_pad, 1024)

    out = pl.pallas_call(
        _scatter_mean_kernel,
        out_shape=jax.ShapeDtypeStruct((c_pad, f_pad), jnp.float32),
        grid=(n_pad // tk,),
        in_specs=[
            pl.BlockSpec((c_pad, tk), lambda k: (0, k)),
            pl.BlockSpec((tk, f_pad), lambda k: (k, 0)),
        ],
        out_specs=pl.BlockSpec((c_pad, f_pad), lambda k: (0, 0)),
        compiler_params=pltpu.CompilerParams(
            dimension_semantics=("arbitrary",)),
    )(s_p, h_p.astype(jnp.bfloat16))
    return out[:num_clusters, :num_feats]


# ----------------------------------------------------------------------------
# Glue: dense operators built from edge_index / cluster (plain JAX)
# ----------------------------------------------------------------------------
def build_mean_adjacency(edge_index, num_nodes):
    """A_norm[i, j] = (#edges j->i) / in_deg(i); rows with no in-edges stay 0."""
    # TODO(synk): for real graph sizes replace this dense O(N^2) operator with a
    # block-sparse / scalar-prefetch gather formulation.
    src = edge_index[0]
    dst = edge_index[1]
    a = jnp.zeros((num_nodes, num_nodes), jnp.float32).at[dst, src].add(1.0)
    deg = a.sum(axis=1, keepdims=True)
    return a / jnp.maximum(deg, 1.0)


def build_cluster_mean_matrix(cluster, num_clusters):
    """S[c, i] = 1/count(c) if cluster[i]==c else 0 (empty clusters -> 0 row)."""
    onehot = (cluster[None, :] == jnp.arange(num_clusters)[:, None]).astype(jnp.float32)
    counts = onehot.sum(axis=1, keepdims=True)
    return onehot / jnp.maximum(counts, 1.0)


# ----------------------------------------------------------------------------
# Parameter init (deterministic, PyG-Linear-like glorot); weights stored [in, out]
# ----------------------------------------------------------------------------
def init_sage_params(key, in_channels, hidden_channels, out_channels, num_layers):
    dims = [(in_channels, hidden_channels)]
    for _ in range(num_layers - 2):
        dims.append((hidden_channels, hidden_channels))
    dims.append((hidden_channels, out_channels))
    params = []
    for (f_in, f_out) in dims:
        key, k1, k2 = jax.random.split(key, 3)
        scale = (6.0 / (f_in + f_out)) ** 0.5
        w_l = jax.random.uniform(k1, (f_in, f_out), jnp.float32, -scale, scale)
        w_r = jax.random.uniform(k2, (f_in, f_out), jnp.float32, -scale, scale)
        b_l = jnp.zeros((f_out,), jnp.float32)
        params.append((w_l, w_r, b_l))
    return params


# ----------------------------------------------------------------------------
# SAGE.forward
# ----------------------------------------------------------------------------
def sage_forward(params, x, a_norm, s_mean):
    """Mirrors SAGE.forward: returns (x_final, out_pre_last_hidden, g, x_final)."""
    n, f_in = x.shape
    num_clusters = s_mean.shape[0]
    n_pad = _round_up(n, 128)

    # Hoisted once for the whole forward pass: padded bf16 adjacency + features.
    a_p = _pad2d(a_norm.astype(jnp.bfloat16), n_pad, n_pad)
    h_p = _pad2d(x.astype(jnp.bfloat16), n_pad, _round_up(f_in, 128))

    out_pre_p = None
    pre_feats = None
    num_hidden = len(params) - 1
    for li, (w_l, w_r, b_l) in enumerate(params[:-1]):
        f_out = w_l.shape[1]
        f_out_pad = _round_up(f_out, 128)
        xw, root = sage_project(h_p, w_l, w_r, b_l, f_out_pad)
        want_pre = (li == num_hidden - 1)      # only the last hidden pre is returned
        res = sage_aggregate(a_p, xw, root, apply_relu=True,
                             want_pre=want_pre, out_dtype=jnp.bfloat16)
        if want_pre:
            h_p, out_pre_p = res
            pre_feats = f_out
        else:
            h_p = res
        # F.dropout: eval-mode identity here.
        # TODO(synk): training-mode dropout would need pltpu.prng_random_bits masking.

    hidden_feats = params[-2][0].shape[1]
    g = scatter_mean(s_mean, h_p, num_clusters, hidden_feats)

    w_l, w_r, b_l = params[-1]
    f_out = w_l.shape[1]
    f_out_pad = _round_up(f_out, 128)
    xw, root = sage_project(h_p, w_l, w_r, b_l, f_out_pad)
    x_final_p = sage_aggregate(a_p, xw, root, apply_relu=False,
                               want_pre=False, out_dtype=jnp.float32)

    x_final = x_final_p[:n, :f_out]
    out_pre = out_pre_p[:n, :pre_feats].astype(jnp.float32)
    return x_final, out_pre, g, x_final


# ----------------------------------------------------------------------------
# Pure-JAX f32 reference (for correctness check only)
# ----------------------------------------------------------------------------
def reference_forward(params, x, a_norm, s_mean):
    h = x
    out_pre = None
    for (w_l, w_r, b_l) in params[:-1]:
        pre = a_norm @ h @ w_l + b_l + h @ w_r
        out_pre = pre
        h = jnp.maximum(pre, 0.0)
    g = s_mean @ h
    w_l, w_r, b_l = params[-1]
    xf = a_norm @ h @ w_l + b_l + h @ w_r
    return xf, out_pre, g


# ----------------------------------------------------------------------------
# Example run
# ----------------------------------------------------------------------------
if __name__ == "__main__":
    key = jax.random.PRNGKey(0)
    k_x, k_e1, k_e2, k_c, k_p = jax.random.split(key, 5)

    num_nodes = 16
    in_channels = 8
    hidden_channels = 32
    out_channels = 16
    num_layers = 3
    num_edges = 48

    x = jax.random.normal(k_x, (num_nodes, in_channels), jnp.float32)
    src = jax.random.randint(k_e1, (num_edges,), 0, num_nodes)
    dst = jax.random.randint(k_e2, (num_edges,), 0, num_nodes)
    edge_index = jnp.stack([src, dst], axis=0)                      # [2, E]
    cluster = jax.random.randint(k_c, (num_nodes,), 0, 4)           # [N]
    num_clusters = int(cluster.max()) + 1                           # cluster.max()+1

    a_norm = build_mean_adjacency(edge_index, num_nodes)
    s_mean = build_cluster_mean_matrix(cluster, num_clusters)
    params = init_sage_params(k_p, in_channels, hidden_channels,
                              out_channels, num_layers)

    fwd = jax.jit(sage_forward)
    x_final, out_pre, g, x_final2 = fwd(params, x, a_norm, s_mean)
    jax.block_until_ready((x_final, out_pre, g, x_final2))

    assert x_final.shape == (num_nodes, out_channels)
    assert out_pre.shape == (num_nodes, hidden_channels)
    assert g.shape == (num_clusters, hidden_channels)

    # bf16-tolerance correctness check against a pure-JAX f32 reference.
    xf_ref, pre_ref, g_ref = reference_forward(params, x, a_norm, s_mean)
    assert jnp.allclose(x_final, xf_ref, atol=1e-1, rtol=1e-1)
    assert jnp.allclose(out_pre, pre_ref, atol=1e-1, rtol=1e-1)
    assert jnp.allclose(g, g_ref, atol=1e-1, rtol=1e-1)

    print("KERNEL_OK")
</pallas_src>

<mosaic_0001>
module attributes {stable_mosaic.version = 11 : i64} {
  func.func @_project_kernel(%arg0: i32, %arg1: memref<128x128xbf16, #tpu.memory_space<vmem>>, %arg2: memref<128x128xbf16, #tpu.memory_space<vmem>>, %arg3: memref<128x128xbf16, #tpu.memory_space<vmem>>, %arg4: memref<1x128xf32, #tpu.memory_space<vmem>>, %arg5: memref<128x128xbf16, #tpu.memory_space<vmem>>, %arg6: memref<128x128xf32, #tpu.memory_space<vmem>>) attributes {dimension_semantics = [#tpu.dimension_semantics<parallel>], iteration_bounds = array<i64: 1>, scalar_prefetch = 0 : i64, scratch_operands = 0 : i64, tpu.core_type = #tpu.core_type<tc>, window_params = [{transform_indices = @transform_0, window_bounds = array<i64: 128, 128>}, {pipeline_mode = #tpu.pipeline_mode<synchronous>, transform_indices = @transform_1, window_bounds = array<i64: 128, 128>}, {pipeline_mode = #tpu.pipeline_mode<synchronous>, transform_indices = @transform_2, window_bounds = array<i64: 128, 128>}, {pipeline_mode = #tpu.pipeline_mode<synchronous>, transform_indices = @transform_3, window_bounds = array<i64: 1, 128>}, {transform_indices = @transform_4, window_bounds = array<i64: 128, 128>}, {transform_indices = @transform_5, window_bounds = array<i64: 128, 128>}]} {
    %c0 = arith.constant 0 : index
    %c0_0 = arith.constant 0 : index
    %0 = vector.load %arg1[%c0, %c0_0] : memref<128x128xbf16, #tpu.memory_space<vmem>>, vector<128x128xbf16>
    %c0_1 = arith.constant 0 : index
    %c0_2 = arith.constant 0 : index
    %1 = vector.load %arg2[%c0_1, %c0_2] : memref<128x128xbf16, #tpu.memory_space<vmem>>, vector<128x128xbf16>
    %cst = arith.constant dense<0.000000e+00> : vector<128x128xf32>
    %2 = tpu.matmul %0, %1, %cst {dimension_numbers = #tpu.dot_dimension_numbers<[1], [0], [0], [1], [0, 0, 1, 1], [], []>} : vector<128x128xbf16>, vector<128x128xbf16>, vector<128x128xf32> -> vector<128x128xf32>
    %3 = arith.truncf %2 : vector<128x128xf32> to vector<128x128xbf16>
    %c0_3 = arith.constant 0 : index
    %c0_4 = arith.constant 0 : index
    %4 = vector.load %arg5[%c0_3, %c0_4] : memref<128x128xbf16, #tpu.memory_space<vmem>>, vector<128x128xbf16>
    tpu.vector_store %arg5[%c0_3, %c0_4], %3 {strides = array<i32>} : memref<128x128xbf16, #tpu.memory_space<vmem>>, vector<128x128xbf16>,
    %c0_5 = arith.constant 0 : index
    %c0_6 = arith.constant 0 : index
    %5 = vector.load %arg3[%c0_5, %c0_6] : memref<128x128xbf16, #tpu.memory_space<vmem>>, vector<128x128xbf16>
    %cst_7 = arith.constant dense<0.000000e+00> : vector<128x128xf32>
    %6 = tpu.matmul %0, %5, %cst_7 {dimension_numbers = #tpu.dot_dimension_numbers<[1], [0], [0], [1], [0, 0, 1, 1], [], []>} : vector<128x128xbf16>, vector<128x128xbf16>, vector<128x128xf32> -> vector<128x128xf32>
    %c0_8 = arith.constant 0 : index
    %c0_9 = arith.constant 0 : index
    %7 = vector.load %arg4[%c0_8, %c0_9] : memref<1x128xf32, #tpu.memory_space<vmem>>, vector<1x128xf32>
    %8 = vector.broadcast %7 : vector<1x128xf32> to vector<128x128xf32>
    %9 = arith.addf %6, %8 : vector<128x128xf32>
    %c0_10 = arith.constant 0 : index
    %c0_11 = arith.constant 0 : index
    %10 = vector.load %arg6[%c0_10, %c0_11] : memref<128x128xf32, #tpu.memory_space<vmem>>, vector<128x128xf32>
    tpu.vector_store %arg6[%c0_10, %c0_11], %9 {strides = array<i32>} : memref<128x128xf32, #tpu.memory_space<vmem>>, vector<128x128xf32>,
    return
  }
  func.func @transform_0(%arg0: i32) -> (i32, i32) {
    %c0_i32 = arith.constant 0 : i32
    %c0_i32_0 = arith.constant 0 : i32
    return %arg0, %c0_i32 : i32, i32
  }
  func.func @transform_1(%arg0: i32) -> (i32, i32) {
    %c0_i32 = arith.constant 0 : i32
    %c0_i32_0 = arith.constant 0 : i32
    %c0_i32_1 = arith.constant 0 : i32
    return %c0_i32, %c0_i32_0 : i32, i32
  }
  func.func @transform_2(%arg0: i32) -> (i32, i32) {
    %c0_i32 = arith.constant 0 : i32
    %c0_i32_0 = arith.constant 0 : i32
    %c0_i32_1 = arith.constant 0 : i32
    return %c0_i32, %c0_i32_0 : i32, i32
  }
  func.func @transform_3(%arg0: i32) -> (i32, i32) {
    %c0_i32 = arith.constant 0 : i32
    %c0_i32_0 = arith.constant 0 : i32
    %c0_i32_1 = arith.constant 0 : i32
    return %c0_i32, %c0_i32_0 : i32, i32
  }
  func.func @transform_4(%arg0: i32) -> (i32, i32) {
    %c0_i32 = arith.constant 0 : i32
    %c0_i32_0 = arith.constant 0 : i32
    return %arg0, %c0_i32 : i32, i32
  }
  func.func @transform_5(%arg0: i32) -> (i32, i32) {
    %c0_i32 = arith.constant 0 : i32
    %c0_i32_0 = arith.constant 0 : i32
    return %arg0, %c0_i32 : i32, i32
  }
}

module attributes {stable_mosaic.version = 11 : i64} {
  func.func @_aggregate_kernel(%arg0: i32, %arg1: i32, %arg2: memref<128x128xbf16, #tpu.memory_space<vmem>>, %arg3: memref<128x128xbf16, #tpu.memory_space<vmem>>, %arg4: memref<128x128xf32, #tpu.memory_space<vmem>>, %arg5: memref<128x128xbf16, #tpu.memory_space<vmem>>, %arg6: memref<128x128xf32, #tpu.memory_space<vmem>>) attributes {dimension_semantics = [#tpu.dimension_semantics<parallel>, #tpu.dimension_semantics<arbitrary>], iteration_bounds = array<i64: 1, 1>, scalar_prefetch = 0 : i64, scratch_operands = 1 : i64, tpu.core_type = #tpu.core_type<tc>, window_params = [{transform_indices = @transform_0, window_bounds = array<i64: 128, 128>}, {transform_indices = @transform_1, window_bounds = array<i64: 128, 128>}, {transform_indices = @transform_2, window_bounds = array<i64: 128, 128>}, {transform_indices = @transform_3, window_bounds = array<i64: 128, 128>}]} {
    %c0_i32 = arith.constant 0 : i32
    %0 = arith.cmpi eq, %arg1, %c0_i32 : i32
    %1 = arith.extui %0 : i1 to i32
    %c0_i32_0 = arith.constant 0 : i32
    %2 = arith.cmpi ne, %1, %c0_i32_0 : i32
    scf.if %2 {
      %c0_10 = arith.constant 0 : index
      %c0_11 = arith.constant 0 : index
      %12 = vector.load %arg4[%c0_10, %c0_11] : memref<128x128xf32, #tpu.memory_space<vmem>>, vector<128x128xf32>
      %c0_12 = arith.constant 0 : index
      %c0_13 = arith.constant 0 : index
      %13 = vector.load %arg6[%c0_12, %c0_13] : memref<128x128xf32, #tpu.memory_space<vmem>>, vector<128x128xf32>
      tpu.vector_store %arg6[%c0_12, %c0_13], %12 {strides = array<i32>} : memref<128x128xf32, #tpu.memory_space<vmem>>, vector<128x128xf32>,
    } else {
    }
    %c0 = arith.constant 0 : index
    %c0_1 = arith.constant 0 : index
    %3 = vector.load %arg6[%c0, %c0_1] : memref<128x128xf32, #tpu.memory_space<vmem>>, vector<128x128xf32>
    %c0_2 = arith.constant 0 : index
    %c0_3 = arith.constant 0 : index
    %4 = vector.load %arg2[%c0_2, %c0_3] : memref<128x128xbf16, #tpu.memory_space<vmem>>, vector<128x128xbf16>
    %c0_4 = arith.constant 0 : index
    %c0_5 = arith.constant 0 : index
    %5 = vector.load %arg3[%c0_4, %c0_5] : memref<128x128xbf16, #tpu.memory_space<vmem>>, vector<128x128xbf16>
    %cst = arith.constant dense<0.000000e+00> : vector<128x128xf32>
    %6 = tpu.matmul %4, %5, %cst {dimension_numbers = #tpu.dot_dimension_numbers<[1], [0], [0], [1], [0, 0, 1, 1], [], []>} : vector<128x128xbf16>, vector<128x128xbf16>, vector<128x128xf32> -> vector<128x128xf32>
    %7 = arith.addf %3, %6 : vector<128x128xf32>
    %c0_6 = arith.constant 0 : index
    %c0_7 = arith.constant 0 : index
    %8 = vector.load %arg6[%c0_6, %c0_7] : memref<128x128xf32, #tpu.memory_space<vmem>>, vector<128x128xf32>
    tpu.vector_store %arg6[%c0_6, %c0_7], %7 {strides = array<i32>} : memref<128x128xf32, #tpu.memory_space<vmem>>, vector<128x128xf32>,
    %c0_i32_8 = arith.constant 0 : i32
    %9 = arith.cmpi eq, %arg1, %c0_i32_8 : i32
    %10 = arith.extui %9 : i1 to i32
    %c0_i32_9 = arith.constant 0 : i32
    %11 = arith.cmpi ne, %10, %c0_i32_9 : i32
    scf.if %11 {
      %c0_10 = arith.constant 0 : index
      %c0_11 = arith.constant 0 : index
      %12 = vector.load %arg6[%c0_10, %c0_11] : memref<128x128xf32, #tpu.memory_space<vmem>>, vector<128x128xf32>
      %cst_12 = arith.constant 0.000000e+00 : f32
      %13 = vector.broadcast %cst_12 : f32 to vector<128x128xf32>
      %14 = arith.maximumf %12, %13 : vector<128x128xf32>
      %15 = arith.truncf %14 : vector<128x128xf32> to vector<128x128xbf16>
      %c0_13 = arith.constant 0 : index
      %c0_14 = arith.constant 0 : index
      %16 = vector.load %arg5[%c0_13, %c0_14] : memref<128x128xbf16, #tpu.memory_space<vmem>>, vector<128x128xbf16>
      tpu.vector_store %arg5[%c0_13, %c0_14], %15 {strides = array<i32>} : memref<128x128xbf16, #tpu.memory_space<vmem>>, vector<128x128xbf16>,
    } else {
    }
    return
  }
  func.func @transform_0(%arg0: i32, %arg1: i32) -> (i32, i32) {
    %c0_i32 = arith.constant 0 : i32
    return %arg0, %arg1 : i32, i32
  }
  func.func @transform_1(%arg0: i32, %arg1: i32) -> (i32, i32) {
    %c0_i32 = arith.constant 0 : i32
    %c0_i32_0 = arith.constant 0 : i32
    return %arg1, %c0_i32 : i32, i32
  }
  func.func @transform_2(%arg0: i32, %arg1: i32) -> (i32, i32) {
    %c0_i32 = arith.constant 0 : i32
    %c0_i32_0 = arith.constant 0 : i32
    return %arg0, %c0_i32 : i32, i32
  }
  func.func @transform_3(%arg0: i32, %arg1: i32) -> (i32, i32) {
    %c0_i32 = arith.constant 0 : i32
    %c0_i32_0 = arith.constant 0 : i32
    return %arg0, %c0_i32 : i32, i32
  }
}

module attributes {stable_mosaic.version = 11 : i64} {
  func.func @_aggregate_kernel(%arg0: i32, %arg1: i32, %arg2: memref<128x128xbf16, #tpu.memory_space<vmem>>, %arg3: memref<128x128xbf16, #tpu.memory_space<vmem>>, %arg4: memref<128x128xf32, #tpu.memory_space<vmem>>, %arg5: memref<128x128xbf16, #tpu.memory_space<vmem>>, %arg6: memref<128x128xbf16, #tpu.memory_space<vmem>>, %arg7: memref<128x128xf32, #tpu.memory_space<vmem>>) attributes {dimension_semantics = [#tpu.dimension_semantics<parallel>, #tpu.dimension_semantics<arbitrary>], iteration_bounds = array<i64: 1, 1>, scalar_prefetch = 0 : i64, scratch_operands = 1 : i64, tpu.core_type = #tpu.core_type<tc>, window_params = [{transform_indices = @transform_0, window_bounds = array<i64: 128, 128>}, {transform_indices = @transform_1, window_bounds = array<i64: 128, 128>}, {transform_indices = @transform_2, window_bounds = array<i64: 128, 128>}, {transform_indices = @transform_3, window_bounds = array<i64: 128, 128>}, {transform_indices = @transform_4, window_bounds = array<i64: 128, 128>}]} {
    %c0_i32 = arith.constant 0 : i32
    %0 = arith.cmpi eq, %arg1, %c0_i32 : i32
    %1 = arith.extui %0 : i1 to i32
    %c0_i32_0 = arith.constant 0 : i32
    %2 = arith.cmpi ne, %1, %c0_i32_0 : i32
    scf.if %2 {
      %c0_10 = arith.constant 0 : index
      %c0_11 = arith.constant 0 : index
      %12 = vector.load %arg4[%c0_10, %c0_11] : memref<128x128xf32, #tpu.memory_space<vmem>>, vector<128x128xf32>
      %c0_12 = arith.constant 0 : index
      %c0_13 = arith.constant 0 : index
      %13 = vector.load %arg7[%c0_12, %c0_13] : memref<128x128xf32, #tpu.memory_space<vmem>>, vector<128x128xf32>
      tpu.vector_store %arg7[%c0_12, %c0_13], %12 {strides = array<i32>} : memref<128x128xf32, #tpu.memory_space<vmem>>, vector<128x128xf32>,
    } else {
    }
    %c0 = arith.constant 0 : index
    %c0_1 = arith.constant 0 : index
    %3 = vector.load %arg7[%c0, %c0_1] : memref<128x128xf32, #tpu.memory_space<vmem>>, vector<128x128xf32>
    %c0_2 = arith.constant 0 : index
    %c0_3 = arith.constant 0 : index
    %4 = vector.load %arg2[%c0_2, %c0_3] : memref<128x128xbf16, #tpu.memory_space<vmem>>, vector<128x128xbf16>
    %c0_4 = arith.constant 0 : index
    %c0_5 = arith.constant 0 : index
    %5 = vector.load %arg3[%c0_4, %c0_5] : memref<128x128xbf16, #tpu.memory_space<vmem>>, vector<128x128xbf16>
    %cst = arith.constant dense<0.000000e+00> : vector<128x128xf32>
    %6 = tpu.matmul %4, %5, %cst {dimension_numbers = #tpu.dot_dimension_numbers<[1], [0], [0], [1], [0, 0, 1, 1], [], []>} : vector<128x128xbf16>, vector<128x128xbf16>, vector<128x128xf32> -> vector<128x128xf32>
    %7 = arith.addf %3, %6 : vector<128x128xf32>
    %c0_6 = arith.constant 0 : index
    %c0_7 = arith.constant 0 : index
    %8 = vector.load %arg7[%c0_6, %c0_7] : memref<128x128xf32, #tpu.memory_space<vmem>>, vector<128x128xf32>
    tpu.vector_store %arg7[%c0_6, %c0_7], %7 {strides = array<i32>} : memref<128x128xf32, #tpu.memory_space<vmem>>, vector<128x128xf32>,
    %c0_i32_8 = arith.constant 0 : i32
    %9 = arith.cmpi eq, %arg1, %c0_i32_8 : i32
    %10 = arith.extui %9 : i1 to i32
    %c0_i32_9 = arith.constant 0 : i32
    %11 = arith.cmpi ne, %10, %c0_i32_9 : i32
    scf.if %11 {
      %c0_10 = arith.constant 0 : index
      %c0_11 = arith.constant 0 : index
      %12 = vector.load %arg7[%c0_10, %c0_11] : memref<128x128xf32, #tpu.memory_space<vmem>>, vector<128x128xf32>
      %13 = arith.truncf %12 : vector<128x128xf32> to vector<128x128xbf16>
      %c0_12 = arith.constant 0 : index
      %c0_13 = arith.constant 0 : index
      %14 = vector.load %arg6[%c0_12, %c0_13] : memref<128x128xbf16, #tpu.memory_space<vmem>>, vector<128x128xbf16>
      tpu.vector_store %arg6[%c0_12, %c0_13], %13 {strides = array<i32>} : memref<128x128xbf16, #tpu.memory_space<vmem>>, vector<128x128xbf16>,
      %cst_14 = arith.constant 0.000000e+00 : f32
      %15 = vector.broadcast %cst_14 : f32 to vector<128x128xf32>
      %16 = arith.maximumf %12, %15 : vector<128x128xf32>
      %17 = arith.truncf %16 : vector<128x128xf32> to vector<128x128xbf16>
      %c0_15 = arith.constant 0 : index
      %c0_16 = arith.constant 0 : index
      %18 = vector.load %arg5[%c0_15, %c0_16] : memref<128x128xbf16, #tpu.memory_space<vmem>>, vector<128x128xbf16>
      tpu.vector_store %arg5[%c0_15, %c0_16], %17 {strides = array<i32>} : memref<128x128xbf16, #tpu.memory_space<vmem>>, vector<128x128xbf16>,
    } else {
    }
    return
  }
  func.func @transform_0(%arg0: i32, %arg1: i32) -> (i32, i32) {
    %c0_i32 = arith.constant 0 : i32
    return %arg0, %arg1 : i32, i32
  }
  func.func @transform_1(%arg0: i32, %arg1: i32) -> (i32, i32) {
    %c0_i32 = arith.constant 0 : i32
    %c0_i32_0 = arith.constant 0 : i32
    return %arg1, %c0_i32 : i32, i32
  }
  func.func @transform_2(%arg0: i32, %arg1: i32) -> (i32, i32) {
    %c0_i32 = arith.constant 0 : i32
    %c0_i32_0 = arith.constant 0 : i32
    return %arg0, %c0_i32 : i32, i32
  }
  func.func @transform_3(%arg0: i32, %arg1: i32) -> (i32, i32) {
    %c0_i32 = arith.constant 0 : i32
    %c0_i32_0 = arith.constant 0 : i32
    return %arg0, %c0_i32 : i32, i32
  }
  func.func @transform_4(%arg0: i32, %arg1: i32) -> (i32, i32) {
    %c0_i32 = arith.constant 0 : i32
    %c0_i32_0 = arith.constant 0 : i32
    return %arg0, %c0_i32 : i32, i32
  }
}

module attributes {stable_mosaic.version = 11 : i64} {
  func.func @_aggregate_kernel(%arg0: i32, %arg1: i32, %arg2: memref<128x128xbf16, #tpu.memory_space<vmem>>, %arg3: memref<128x128xbf16, #tpu.memory_space<vmem>>, %arg4: memref<128x128xf32, #tpu.memory_space<vmem>>, %arg5: memref<128x128xf32, #tpu.memory_space<vmem>>, %arg6: memref<128x128xf32, #tpu.memory_space<vmem>>) attributes {dimension_semantics = [#tpu.dimension_semantics<parallel>, #tpu.dimension_semantics<arbitrary>], iteration_bounds = array<i64: 1, 1>, scalar_prefetch = 0 : i64, scratch_operands = 1 : i64, tpu.core_type = #tpu.core_type<tc>, window_params = [{transform_indices = @transform_0, window_bounds = array<i64: 128, 128>}, {transform_indices = @transform_1, window_bounds = array<i64: 128, 128>}, {transform_indices = @transform_2, window_bounds = array<i64: 128, 128>}, {transform_indices = @transform_3, window_bounds = array<i64: 128, 128>}]} {
    %c0_i32 = arith.constant 0 : i32
    %0 = arith.cmpi eq, %arg1, %c0_i32 : i32
    %1 = arith.extui %0 : i1 to i32
    %c0_i32_0 = arith.constant 0 : i32
    %2 = arith.cmpi ne, %1, %c0_i32_0 : i32
    scf.if %2 {
      %c0_10 = arith.constant 0 : index
      %c0_11 = arith.constant 0 : index
      %12 = vector.load %arg4[%c0_10, %c0_11] : memref<128x128xf32, #tpu.memory_space<vmem>>, vector<128x128xf32>
      %c0_12 = arith.constant 0 : index
      %c0_13 = arith.constant 0 : index
      %13 = vector.load %arg6[%c0_12, %c0_13] : memref<128x128xf32, #tpu.memory_space<vmem>>, vector<128x128xf32>
      tpu.vector_store %arg6[%c0_12, %c0_13], %12 {strides = array<i32>} : memref<128x128xf32, #tpu.memory_space<vmem>>, vector<128x128xf32>,
    } else {
    }
    %c0 = arith.constant 0 : index
    %c0_1 = arith.constant 0 : index
    %3 = vector.load %arg6[%c0, %c0_1] : memref<128x128xf32, #tpu.memory_space<vmem>>, vector<128x128xf32>
    %c0_2 = arith.constant 0 : index
    %c0_3 = arith.constant 0 : index
    %4 = vector.load %arg2[%c0_2, %c0_3] : memref<128x128xbf16, #tpu.memory_space<vmem>>, vector<128x128xbf16>
    %c0_4 = arith.constant 0 : index
    %c0_5 = arith.constant 0 : index
    %5 = vector.load %arg3[%c0_4, %c0_5] : memref<128x128xbf16, #tpu.memory_space<vmem>>, vector<128x128xbf16>
    %cst = arith.constant dense<0.000000e+00> : vector<128x128xf32>
    %6 = tpu.matmul %4, %5, %cst {dimension_numbers = #tpu.dot_dimension_numbers<[1], [0], [0], [1], [0, 0, 1, 1], [], []>} : vector<128x128xbf16>, vector<128x128xbf16>, vector<128x128xf32> -> vector<128x128xf32>
    %7 = arith.addf %3, %6 : vector<128x128xf32>
    %c0_6 = arith.constant 0 : index
    %c0_7 = arith.constant 0 : index
    %8 = vector.load %arg6[%c0_6, %c0_7] : memref<128x128xf32, #tpu.memory_space<vmem>>, vector<128x128xf32>
    tpu.vector_store %arg6[%c0_6, %c0_7], %7 {strides = array<i32>} : memref<128x128xf32, #tpu.memory_space<vmem>>, vector<128x128xf32>,
    %c0_i32_8 = arith.constant 0 : i32
    %9 = arith.cmpi eq, %arg1, %c0_i32_8 : i32
    %10 = arith.extui %9 : i1 to i32
    %c0_i32_9 = arith.constant 0 : i32
    %11 = arith.cmpi ne, %10, %c0_i32_9 : i32
    scf.if %11 {
      %c0_10 = arith.constant 0 : index
      %c0_11 = arith.constant 0 : index
      %12 = vector.load %arg6[%c0_10, %c0_11] : memref<128x128xf32, #tpu.memory_space<vmem>>, vector<128x128xf32>
      %c0_12 = arith.constant 0 : index
      %c0_13 = arith.constant 0 : index
      %13 = vector.load %arg5[%c0_12, %c0_13] : memref<128x128xf32, #tpu.memory_space<vmem>>, vector<128x128xf32>
      tpu.vector_store %arg5[%c0_12, %c0_13], %12 {strides = array<i32>} : memref<128x128xf32, #tpu.memory_space<vmem>>, vector<128x128xf32>,
    } else {
    }
    return
  }
  func.func @transform_0(%arg0: i32, %arg1: i32) -> (i32, i32) {
    %c0_i32 = arith.constant 0 : i32
    return %arg0, %arg1 : i32, i32
  }
  func.func @transform_1(%arg0: i32, %arg1: i32) -> (i32, i32) {
    %c0_i32 = arith.constant 0 : i32
    %c0_i32_0 = arith.constant 0 : i32
    return %arg1, %c0_i32 : i32, i32
  }
  func.func @transform_2(%arg0: i32, %arg1: i32) -> (i32, i32) {
    %c0_i32 = arith.constant 0 : i32
    %c0_i32_0 = arith.constant 0 : i32
    return %arg0, %c0_i32 : i32, i32
  }
  func.func @transform_3(%arg0: i32, %arg1: i32) -> (i32, i32) {
    %c0_i32 = arith.constant 0 : i32
    %c0_i32_0 = arith.constant 0 : i32
    return %arg0, %c0_i32 : i32, i32
  }
}

module attributes {stable_mosaic.version = 11 : i64} {
  func.func @_scatter_mean_kernel(%arg0: i32, %arg1: memref<16x128xbf16, #tpu.memory_space<vmem>>, %arg2: memref<128x128xbf16, #tpu.memory_space<vmem>>, %arg3: memref<16x128xf32, #tpu.memory_space<vmem>>) attributes {dimension_semantics = [#tpu.dimension_semantics<arbitrary>], iteration_bounds = array<i64: 1>, scalar_prefetch = 0 : i64, scratch_operands = 0 : i64, tpu.core_type = #tpu.core_type<tc>, window_params = [{transform_indices = @transform_0, window_bounds = array<i64: 16, 128>}, {transform_indices = @transform_1, window_bounds = array<i64: 128, 128>}, {pipeline_mode = #tpu.pipeline_mode<synchronous>, transform_indices = @transform_2, window_bounds = array<i64: 16, 128>}]} {
    %c0_i32 = arith.constant 0 : i32
    %0 = arith.cmpi eq, %arg0, %c0_i32 : i32
    %1 = arith.extui %0 : i1 to i32
    %c0_i32_0 = arith.constant 0 : i32
    %2 = arith.cmpi ne, %1, %c0_i32_0 : i32
    scf.if %2 {
      %cst_8 = arith.constant 0.000000e+00 : f32
      %9 = vector.broadcast %cst_8 : f32 to vector<16x128xf32>
      %c0_9 = arith.constant 0 : index
      %c0_10 = arith.constant 0 : index
      %10 = vector.load %arg3[%c0_9, %c0_10] : memref<16x128xf32, #tpu.memory_space<vmem>>, vector<16x128xf32>
      tpu.vector_store %arg3[%c0_9, %c0_10], %9 {strides = array<i32>} : memref<16x128xf32, #tpu.memory_space<vmem>>, vector<16x128xf32>,
    } else {
    }
    %c0 = arith.constant 0 : index
    %c0_1 = arith.constant 0 : index
    %3 = vector.load %arg3[%c0, %c0_1] : memref<16x128xf32, #tpu.memory_space<vmem>>, vector<16x128xf32>
    %c0_2 = arith.constant 0 : index
    %c0_3 = arith.constant 0 : index
    %4 = vector.load %arg1[%c0_2, %c0_3] : memref<16x128xbf16, #tpu.memory_space<vmem>>, vector<16x128xbf16>
    %c0_4 = arith.constant 0 : index
    %c0_5 = arith.constant 0 : index
    %5 = vector.load %arg2[%c0_4, %c0_5] : memref<128x128xbf16, #tpu.memory_space<vmem>>, vector<128x128xbf16>
    %cst = arith.constant dense<0.000000e+00> : vector<16x128xf32>
    %6 = tpu.matmul %4, %5, %cst {dimension_numbers = #tpu.dot_dimension_numbers<[1], [0], [0], [1], [0, 0, 1, 1], [], []>} : vector<16x128xbf16>, vector<128x128xbf16>, vector<16x128xf32> -> vector<16x128xf32>
    %7 = arith.addf %3, %6 : vector<16x128xf32>
    %c0_6 = arith.constant 0 : index
    %c0_7 = arith.constant 0 : index
    %8 = vector.load %arg3[%c0_6, %c0_7] : memref<16x128xf32, #tpu.memory_space<vmem>>, vector<16x128xf32>
    tpu.vector_store %arg3[%c0_6, %c0_7], %7 {strides = array<i32>} : memref<16x128xf32, #tpu.memory_space<vmem>>, vector<16x128xf32>,
    return
  }
  func.func @transform_0(%arg0: i32) -> (i32, i32) {
    %c0_i32 = arith.constant 0 : i32
    %c0_i32_0 = arith.constant 0 : i32
    return %c0_i32, %arg0 : i32, i32
  }
  func.func @transform_1(%arg0: i32) -> (i32, i32) {
    %c0_i32 = arith.constant 0 : i32
    %c0_i32_0 = arith.constant 0 : i32
    return %arg0, %c0_i32 : i32, i32
  }
  func.func @transform_2(%arg0: i32) -> (i32, i32) {
    %c0_i32 = arith.constant 0 : i32
    %c0_i32_0 = arith.constant 0 : i32
    %c0_i32_1 = arith.constant 0 : i32
    return %c0_i32, %c0_i32_0 : i32, i32
  }
}

</mosaic_0001>

<llo_original>
// kernel: sage_forward.8
$region0: #{sage_forward.8}
  #allocation0 [shape = 'u32[]', space=smem, size = 0x4, offset = 0x4, fixed_abs, tag = 'smem constant byte address 0x4 - core index']
  #allocation1 [shape = 'u32[144,128]{1,0:T(1,128)}', space=vmem, size = 0x12000, scoped, tag = 'internal scratch']
  #allocation2 [shape = 'f32[128,128]{1,0:T(8,128)}', space=vmem, size = 0x10000, scoped, tag = 'scratch operand']
  %s0 = inlined_call_operand.vmem [shape: bf16[128,128], index: 0, kind: input, shape index: {}]
  %s1 = inlined_call_operand.vmem [shape: bf16[128,128], index: 1, kind: input, shape index: {}]
  %s2 = inlined_call_operand.vmem [shape: f32[128,128], index: 2, kind: input, shape index: {}]
  %s3 = inlined_call_operand.vmem [shape: bf16[128,128], index: 3, kind: output, shape index: {}]
  %s4 = sld [smem:[#allocation0]]
  $region30: #{sage_forward.8} parent=0
    _
  %s6 = ssub.s32 1, %s4
  %s7 = scalar_select 0, %s6, %s4
  // Predicated region
  $region2: #{sage_forward.8} parent=0 // pred_check
    _
  $region3: #{sage_forward.8} parent=0 // pred_check_branch
    %9 = sbr.rel (0) target = $region5
  $region4: #{sage_forward.8} parent=0 // pred_region
    _
  $region5: #{sage_forward.8} parent=0 // pred_fallthru
    _
  // Predicated region
  $region6: #{sage_forward.8} parent=0 // pred_check
    _
  $region7: #{sage_forward.8} parent=0 // pred_check_branch
    %11 = sbr.rel (0) target = $region9
  $region8: #{sage_forward.8} parent=0 // pred_region
    _
  $region9: #{sage_forward.8} parent=0 // pred_fallthru
    _
  // Predicated region
  $region10: #{sage_forward.8} parent=0 // pred_check
    _
  $region11: #{sage_forward.8} parent=0 // pred_check_branch
    %13 = sbr.rel (0) target = $region13
  $region12: #{sage_forward.8} parent=0 // pred_region
    _
  $region13: #{sage_forward.8} parent=0 // pred_fallthru
    _
  %p15 = scmp.eq.s32.totalorder 0, 0
  // Predicated region
  $region14: #{sage_forward.8} parent=0 // pred_check
    %p16 = pneg %p15
  $region15: #{sage_forward.8} parent=0 // pred_check_branch
    %18 = sbr.rel (%p16) target = $region17
  $region16: #{sage_forward.8} parent=0 // pred_region
    %v19 = vld [vmem:[%s2] sm:$0xff]
    %v20 = vld [vmem:[%s2 + $0x8] sm:$0xff]
    %v21 = vld [vmem:[%s2 + $0x10] sm:$0xff]
    %v22 = vld [vmem:[%s2 + $0x18] sm:$0xff]
    %v23 = vld [vmem:[%s2 + $0x20] sm:$0xff]
    %v24 = vld [vmem:[%s2 + $0x28] sm:$0xff]
    %v25 = vld [vmem:[%s2 + $0x30] sm:$0xff]
    %v26 = vld [vmem:[%s2 + $0x38] sm:$0xff]
    %v27 = vld [vmem:[%s2 + $0x40] sm:$0xff]
    %v28 = vld [vmem:[%s2 + $0x48] sm:$0xff]
    %v29 = vld [vmem:[%s2 + $0x50] sm:$0xff]
    %v30 = vld [vmem:[%s2 + $0x58] sm:$0xff]
    %v31 = vld [vmem:[%s2 + $0x60] sm:$0xff]
    %v32 = vld [vmem:[%s2 + $0x68] sm:$0xff]
    %v33 = vld [vmem:[%s2 + $0x70] sm:$0xff]
    %v34 = vld [vmem:[%s2 + $0x78] sm:$0xff]
    %35 = vst [vmem:[#allocation2] sm:$0xff] %v19
    %36 = vst [vmem:[#allocation2 + $0x8] sm:$0xff] %v20
    %37 = vst [vmem:[#allocation2 + $0x10] sm:$0xff] %v21
    %38 = vst [vmem:[#allocation2 + $0x18] sm:$0xff] %v22
    %39 = vst [vmem:[#allocation2 + $0x20] sm:$0xff] %v23
    %40 = vst [vmem:[#allocation2 + $0x28] sm:$0xff] %v24
    %41 = vst [vmem:[#allocation2 + $0x30] sm:$0xff] %v25
    %42 = vst [vmem:[#allocation2 + $0x38] sm:$0xff] %v26
    %43 = vst [vmem:[#allocation2 + $0x40] sm:$0xff] %v27
    %44 = vst [vmem:[#allocation2 + $0x48] sm:$0xff] %v28
    %45 = vst [vmem:[#allocation2 + $0x50] sm:$0xff] %v29
    %46 = vst [vmem:[#allocation2 + $0x58] sm:$0xff] %v30
    %47 = vst [vmem:[#allocation2 + $0x60] sm:$0xff] %v31
    %48 = vst [vmem:[#allocation2 + $0x68] sm:$0xff] %v32
    %49 = vst [vmem:[#allocation2 + $0x70] sm:$0xff] %v33
    %50 = vst [vmem:[#allocation2 + $0x78] sm:$0xff] %v34
  $region17: #{sage_forward.8} parent=0 // pred_fallthru
    _
  %v51 = vld [vmem:[#allocation2] sm:$0xff]
  %v52 = vld [vmem:[#allocation2 + $0x8] sm:$0xff]
  %v53 = vld [vmem:[#allocation2 + $0x10] sm:$0xff]
  %v54 = vld [vmem:[#allocation2 + $0x18] sm:$0xff]
  %v55 = vld [vmem:[#allocation2 + $0x20] sm:$0xff]
  %v56 = vld [vmem:[#allocation2 + $0x28] sm:$0xff]
  %v57 = vld [vmem:[#allocation2 + $0x30] sm:$0xff]
  %v58 = vld [vmem:[#allocation2 + $0x38] sm:$0xff]
  %v59 = vld [vmem:[#allocation2 + $0x40] sm:$0xff]
  %v60 = vld [vmem:[#allocation2 + $0x48] sm:$0xff]
  %v61 = vld [vmem:[#allocation2 + $0x50] sm:$0xff]
  %v62 = vld [vmem:[#allocation2 + $0x58] sm:$0xff]
  %v63 = vld [vmem:[#allocation2 + $0x60] sm:$0xff]
  %v64 = vld [vmem:[#allocation2 + $0x68] sm:$0xff]
  %v65 = vld [vmem:[#allocation2 + $0x70] sm:$0xff]
  %v66 = vld [vmem:[#allocation2 + $0x78] sm:$0xff]
  %v67 = vld [vmem:[%s0] sm:$0xf]
  %v68 = vld [vmem:[%s0 + $0x4] sm:$0xf]
  %v69 = vld [vmem:[%s0 + $0x8] sm:$0xf]
  %v70 = vld [vmem:[%s0 + $0xc] sm:$0xf]
  %v71 = vld [vmem:[%s0 + $0x10] sm:$0xf]
  %v72 = vld [vmem:[%s0 + $0x14] sm:$0xf]
  %v73 = vld [vmem:[%s0 + $0x18] sm:$0xf]
  %v74 = vld [vmem:[%s0 + $0x1c] sm:$0xf]
  %v75 = vld [vmem:[%s0 + $0x20] sm:$0xf]
  %v76 = vld [vmem:[%s0 + $0x24] sm:$0xf]
  %v77 = vld [vmem:[%s0 + $0x28] sm:$0xf]
  %v78 = vld [vmem:[%s0 + $0x2c] sm:$0xf]
  %v79 = vld [vmem:[%s0 + $0x30] sm:$0xf]
  %v80 = vld [vmem:[%s0 + $0x34] sm:$0xf]
  %v81 = vld [vmem:[%s0 + $0x38] sm:$0xf]
  %v82 = vld [vmem:[%s0 + $0x3c] sm:$0xf]
  %v83 = vld [vmem:[%s1] sm:$0xf]
  %v84 = vld [vmem:[%s1 + $0x4] sm:$0xf]
  %v85 = vld [vmem:[%s1 + $0x8] sm:$0xf]
  %v86 = vld [vmem:[%s1 + $0xc] sm:$0xf]
  %v87 = vld [vmem:[%s1 + $0x10] sm:$0xf]
  %v88 = vld [vmem:[%s1 + $0x14] sm:$0xf]
  %v89 = vld [vmem:[%s1 + $0x18] sm:$0xf]
  %v90 = vld [vmem:[%s1 + $0x1c] sm:$0xf]
  %v91 = vld [vmem:[%s1 + $0x20] sm:$0xf]
  %v92 = vld [vmem:[%s1 + $0x24] sm:$0xf]
  %v93 = vld [vmem:[%s1 + $0x28] sm:$0xf]
  %v94 = vld [vmem:[%s1 + $0x2c] sm:$0xf]
  %v95 = vld [vmem:[%s1 + $0x30] sm:$0xf]
  %v96 = vld [vmem:[%s1 + $0x34] sm:$0xf]
  %v97 = vld [vmem:[%s1 + $0x38] sm:$0xf]
  %v98 = vld [vmem:[%s1 + $0x3c] sm:$0xf]
  %v115 = vunpack.c.l.b16 %v67
  %v116 = vunpack.c.l.b16 %v68
  %v117 = vunpack.c.l.b16 %v69
  %v118 = vunpack.c.l.b16 %v70
  %v119 = vunpack.c.l.b16 %v71
  %v120 = vunpack.c.l.b16 %v72
  %v121 = vunpack.c.l.b16 %v73
  %v122 = vunpack.c.l.b16 %v74
  %v123 = vunpack.c.l.b16 %v75
  %v124 = vunpack.c.l.b16 %v76
  %v125 = vunpack.c.l.b16 %v77
  %v126 = vunpack.c.l.b16 %v78
  %v127 = vunpack.c.l.b16 %v79
  %v128 = vunpack.c.l.b16 %v80
  %v129 = vunpack.c.l.b16 %v81
  %v130 = vunpack.c.l.b16 %v82
  %v131 = vpack.c.b16 %v116, %v115
  %v132 = vpack.c.b16 %v118, %v117
  %v133 = vpack.c.b16 %v120, %v119
  %v134 = vpack.c.b16 %v122, %v121
  %v135 = vpack.c.b16 %v124, %v123
  %v136 = vpack.c.b16 %v126, %v125
  %v137 = vpack.c.b16 %v128, %v127
  %v138 = vpack.c.b16 %v130, %v129
  %v163 = vunpack.c.l.b16 %v83
  %v164 = vunpack.c.l.b16 %v84
  %v165 = vunpack.c.l.b16 %v85
  %v166 = vunpack.c.l.b16 %v86
  %v167 = vunpack.c.l.b16 %v87
  %v168 = vunpack.c.l.b16 %v88
  %v169 = vunpack.c.l.b16 %v89
  %v170 = vunpack.c.l.b16 %v90
  %v171 = vunpack.c.l.b16 %v91
  %v172 = vunpack.c.l.b16 %v92
  %v173 = vunpack.c.l.b16 %v93
  %v174 = vunpack.c.l.b16 %v94
  %v175 = vunpack.c.l.b16 %v95
  %v176 = vunpack.c.l.b16 %v96
  %v177 = vunpack.c.l.b16 %v97
  %v178 = vunpack.c.l.b16 %v98
  %v179 = vpack.c.b16 %v164, %v163
  %v180 = vpack.c.b16 %v166, %v165
  %v181 = vpack.c.b16 %v168, %v167
  %v182 = vpack.c.b16 %v170, %v169
  %v183 = vpack.c.b16 %v172, %v171
  %v184 = vpack.c.b16 %v174, %v173
  %v185 = vpack.c.b16 %v176, %v175
  %v186 = vpack.c.b16 %v178, %v177
  %195 = vmatprep.subr.bf16.mxu0 0
  %196 = vmatpush1.bf16.msra.mxu0 %v179
  %197 = vmatprep.subr.bf16.mxu0 0
  %198 = vmatpush1.bf16.msra.mxu0 %v180
  %199 = vmatprep.subr.bf16.mxu0 0
  %200 = vmatpush1.bf16.msra.mxu0 %v181
  %201 = vmatprep.subr.bf16.mxu0 0
  %202 = vmatpush1.bf16.msra.mxu0 %v182
  %203 = vmatprep.subr.bf16.mxu0 0
  %204 = vmatpush1.bf16.msra.mxu0 %v183
  %205 = vmatprep.subr.bf16.mxu0 0
  %206 = vmatpush1.bf16.msra.mxu0 %v184
  %207 = vmatprep.subr.bf16.mxu0 0
  %208 = vmatpush1.bf16.msra.mxu0 %v185
  %209 = vmatprep.subr.bf16.mxu0 0
  %210 = vmatpush1.bf16.msra.mxu0 %v186
  %211 = vmatprep.subr.bf16.mxu0 0
  %212 = vmatpush1.bf16.msra.mxu0 0
  %213 = vmatprep.subr.bf16.mxu0 0
  %214 = vmatpush1.bf16.msra.mxu0 0
  %215 = vmatprep.subr.bf16.mxu0 0
  %216 = vmatpush1.bf16.msra.mxu0 0
  %217 = vmatprep.subr.bf16.mxu0 0
  %218 = vmatpush1.bf16.msra.mxu0 0
  %219 = vmatprep.subr.bf16.mxu0 0
  %220 = vmatpush1.bf16.msra.mxu0 0
  %221 = vmatprep.subr.bf16.mxu0 0
  %222 = vmatpush1.bf16.msra.mxu0 0
  %223 = vmatprep.subr.bf16.mxu0 0
  %224 = vmatpush1.bf16.msra.mxu0 0
  %225 = vmatprep.subr.bf16.mxu0 0
  %226 = vmatpush1.bf16.msra.mxu0 0
  %227 = vmatprep.mubr.bf16.mxu0 0
  %228 = vmatmul.mubr.bf16.gmra.mrb[0].mxu0 %v131
  %v229 = vpop.f32.mrb[0].mxu0
  %v230 = vadd.f32 0.0, %v229
  %v231 = vpop.f32.mrb[0].mxu0
  %v232 = vpop.f32.mrb[0].mxu0
  %v233 = vadd.f32 0.0, %v232
  %v234 = vpop.f32.mrb[0].mxu0
  %235 = vmatprep.mubr.bf16.mxu0 0
  %236 = vmatmul.mubr.bf16.gmra.mrb[0].mxu0 %v132
  %v237 = vpop.f32.mrb[0].mxu0
  %v238 = vadd.f32 0.0, %v237
  %v239 = vpop.f32.mrb[0].mxu0
  %v240 = vpop.f32.mrb[0].mxu0
  %v241 = vadd.f32 0.0, %v240
  %v242 = vpop.f32.mrb[0].mxu0
  %243 = vmatprep.mubr.bf16.mxu0 0
  %244 = vmatmul.mubr.bf16.gmra.mrb[0].mxu0 %v133
  %v245 = vpop.f32.mrb[0].mxu0
  %v246 = vadd.f32 0.0, %v245
  %v247 = vpop.f32.mrb[0].mxu0
  %v248 = vpop.f32.mrb[0].mxu0
  %v249 = vadd.f32 0.0, %v248
  %v250 = vpop.f32.mrb[0].mxu0
  %251 = vmatprep.mubr.bf16.mxu0 0
  %252 = vmatmul.mubr.bf16.gmra.mrb[0].mxu0 %v134
  %v253 = vpop.f32.mrb[0].mxu0
  %v254 = vadd.f32 0.0, %v253
  %v255 = vpop.f32.mrb[0].mxu0
  %v256 = vpop.f32.mrb[0].mxu0
  %v257 = vadd.f32 0.0, %v256
  %v258 = vpop.f32.mrb[0].mxu0
  %259 = vmatprep.mubr.bf16.mxu0 0
  %260 = vmatmul.mubr.bf16.gmra.mrb[0].mxu0 %v135
  %v261 = vpop.f32.mrb[0].mxu0
  %v262 = vadd.f32 0.0, %v261
  %v263 = vpop.f32.mrb[0].mxu0
  %v264 = vpop.f32.mrb[0].mxu0
  %v265 = vadd.f32 0.0, %v264
  %v266 = vpop.f32.mrb[0].mxu0
  %267 = vmatprep.mubr.bf16.mxu0 0
  %268 = vmatmul.mubr.bf16.gmra.mrb[0].mxu0 %v136
  %v269 = vpop.f32.mrb[0].mxu0
  %v270 = vadd.f32 0.0, %v269
  %v271 = vpop.f32.mrb[0].mxu0
  %v272 = vpop.f32.mrb[0].mxu0
  %v273 = vadd.f32 0.0, %v272
  %v274 = vpop.f32.mrb[0].mxu0
  %275 = vmatprep.mubr.bf16.mxu0 0
  %276 = vmatmul.mubr.bf16.gmra.mrb[0].mxu0 %v137
  %v277 = vpop.f32.mrb[0].mxu0
  %v278 = vadd.f32 0.0, %v277
  %v279 = vpop.f32.mrb[0].mxu0
  %v280 = vpop.f32.mrb[0].mxu0
  %v281 = vadd.f32 0.0, %v280
  %v282 = vpop.f32.mrb[0].mxu0
  %283 = vmatprep.mubr.bf16.mxu0 0
  %284 = vmatmul.mubr.bf16.gmra.mrb[0].mxu0 %v138
  %v285 = vpop.f32.mrb[0].mxu0
  %v286 = vadd.f32 0.0, %v285
  %v287 = vpop.f32.mrb[0].mxu0
  %v288 = vpop.f32.mrb[0].mxu0
  %v289 = vadd.f32 0.0, %v288
  %v290 = vpop.f32.mrb[0].mxu0
  %291 = vdwg.mxu0
  %v292 = vadd.f32 %v51, %v230
  %v293 = vadd.f32 %v52, %v233
  %v294 = vadd.f32 %v53, %v238
  %v295 = vadd.f32 %v54, %v241
  %v296 = vadd.f32 %v55, %v246
  %v297 = vadd.f32 %v56, %v249
  %v298 = vadd.f32 %v57, %v254
  %v299 = vadd.f32 %v58, %v257
  %v300 = vadd.f32 %v59, %v262
  %v301 = vadd.f32 %v60, %v265
  %v302 = vadd.f32 %v61, %v270
  %v303 = vadd.f32 %v62, %v273
  %v304 = vadd.f32 %v63, %v278
  %v305 = vadd.f32 %v64, %v281
  %v306 = vadd.f32 %v65, %v286
  %v307 = vadd.f32 %v66, %v289
  %308 = vst [vmem:[#allocation2] sm:$0xff] %v292
  %309 = vst [vmem:[#allocation2 + $0x8] sm:$0xff] %v293
  %310 = vst [vmem:[#allocation2 + $0x10] sm:$0xff] %v294
  %311 = vst [vmem:[#allocation2 + $0x18] sm:$0xff] %v295
  %312 = vst [vmem:[#allocation2 + $0x20] sm:$0xff] %v296
  %313 = vst [vmem:[#allocation2 + $0x28] sm:$0xff] %v297
  %314 = vst [vmem:[#allocation2 + $0x30] sm:$0xff] %v298
  %315 = vst [vmem:[#allocation2 + $0x38] sm:$0xff] %v299
  %316 = vst [vmem:[#allocation2 + $0x40] sm:$0xff] %v300
  %317 = vst [vmem:[#allocation2 + $0x48] sm:$0xff] %v301
  %318 = vst [vmem:[#allocation2 + $0x50] sm:$0xff] %v302
  %319 = vst [vmem:[#allocation2 + $0x58] sm:$0xff] %v303
  %320 = vst [vmem:[#allocation2 + $0x60] sm:$0xff] %v304
  %321 = vst [vmem:[#allocation2 + $0x68] sm:$0xff] %v305
  %322 = vst [vmem:[#allocation2 + $0x70] sm:$0xff] %v306
  %323 = vst [vmem:[#allocation2 + $0x78] sm:$0xff] %v307
  // Predicated region
  $region18: #{sage_forward.8} parent=0 // pred_check
    %p324 = pneg %p15
  $region19: #{sage_forward.8} parent=0 // pred_check_branch
    %326 = sbr.rel (%p324) target = $region21
  $region20: #{sage_forward.8} parent=0 // pred_region
    %v327 = vld [vmem:[#allocation2] sm:$0xff]
    %v328 = vld [vmem:[#allocation2 + $0x8] sm:$0xff]
    %v329 = vld [vmem:[#allocation2 + $0x10] sm:$0xff]
    %v330 = vld [vmem:[#allocation2 + $0x18] sm:$0xff]
    %v331 = vld [vmem:[#allocation2 + $0x20] sm:$0xff]
    %v332 = vld [vmem:[#allocation2 + $0x28] sm:$0xff]
    %v333 = vld [vmem:[#allocation2 + $0x30] sm:$0xff]
    %v334 = vld [vmem:[#allocation2 + $0x38] sm:$0xff]
    %v335 = vld [vmem:[#allocation2 + $0x40] sm:$0xff]
    %v336 = vld [vmem:[#allocation2 + $0x48] sm:$0xff]
    %v337 = vld [vmem:[#allocation2 + $0x50] sm:$0xff]
    %v338 = vld [vmem:[#allocation2 + $0x58] sm:$0xff]
    %v339 = vld [vmem:[#allocation2 + $0x60] sm:$0xff]
    %v340 = vld [vmem:[#allocation2 + $0x68] sm:$0xff]
    %v341 = vld [vmem:[#allocation2 + $0x70] sm:$0xff]
    %v342 = vld [vmem:[#allocation2 + $0x78] sm:$0xff]
    %v343 = vmax.f32 %v327, 0.0
    %v344 = vmax.f32 %v328, 0.0
    %v345 = vmax.f32 %v329, 0.0
    %v346 = vmax.f32 %v330, 0.0
    %v347 = vmax.f32 %v331, 0.0
    %v348 = vmax.f32 %v332, 0.0
    %v349 = vmax.f32 %v333, 0.0
    %v350 = vmax.f32 %v334, 0.0
    %v351 = vmax.f32 %v335, 0.0
    %v352 = vmax.f32 %v336, 0.0
    %v353 = vmax.f32 %v337, 0.0
    %v354 = vmax.f32 %v338, 0.0
    %v355 = vmax.f32 %v339, 0.0
    %v356 = vmax.f32 %v340, 0.0
    %v357 = vmax.f32 %v341, 0.0
    %v358 = vmax.f32 %v342, 0.0
    %v359 = vpack.c.bf16 %v344, %v343
    %v360 = vpack.c.bf16 %v346, %v345
    %v361 = vpack.c.bf16 %v348, %v347
    %v362 = vpack.c.bf16 %v350, %v349
    %v363 = vpack.c.bf16 %v352, %v351
    %v364 = vpack.c.bf16 %v354, %v353
    %v365 = vpack.c.bf16 %v356, %v355
    %v366 = vpack.c.bf16 %v358, %v357
    %v375 = vunpack.c.l.b16 %v359
    %v376 = vunpack.c.h.b16 %v359
    %v377 = vunpack.c.l.b16 %v360
    %v378 = vunpack.c.h.b16 %v360
    %v379 = vunpack.c.l.b16 %v361
    %v380 = vunpack.c.h.b16 %v361
    %v381 = vunpack.c.l.b16 %v362
    %v382 = vunpack.c.h.b16 %v362
    %v383 = vunpack.c.l.b16 %v363
    %v384 = vunpack.c.h.b16 %v363
    %v385 = vunpack.c.l.b16 %v364
    %v386 = vunpack.c.h.b16 %v364
    %v387 = vunpack.c.l.b16 %v365
    %v388 = vunpack.c.h.b16 %v365
    %v389 = vunpack.c.l.b16 %v366
    %v390 = vunpack.c.h.b16 %v366
    %v391 = vpack.c.b16 %v375, %v375
    %v392 = vpack.c.b16 %v376, %v376
    %v393 = vpack.c.b16 %v377, %v377
    %v394 = vpack.c.b16 %v378, %v378
    %v395 = vpack.c.b16 %v379, %v379
    %v396 = vpack.c.b16 %v380, %v380
    %v397 = vpack.c.b16 %v381, %v381
    %v398 = vpack.c.b16 %v382, %v382
    %v399 = vpack.c.b16 %v383, %v383
    %v400 = vpack.c.b16 %v384, %v384
    %v401 = vpack.c.b16 %v385, %v385
    %v402 = vpack.c.b16 %v386, %v386
    %v403 = vpack.c.b16 %v387, %v387
    %v404 = vpack.c.b16 %v388, %v388
    %v405 = vpack.c.b16 %v389, %v389
    %v406 = vpack.c.b16 %v390, %v390
    %423 = vst [vmem:[%s3] sm:$0xf] %v391
    %424 = vst [vmem:[%s3 + $0x4] sm:$0xf] %v392
    %425 = vst [vmem:[%s3 + $0x8] sm:$0xf] %v393
    %426 = vst [vmem:[%s3 + $0xc] sm:$0xf] %v394
    %427 = vst [vmem:[%s3 + $0x10] sm:$0xf] %v395
    %428 = vst [vmem:[%s3 + $0x14] sm:$0xf] %v396
    %429 = vst [vmem:[%s3 + $0x18] sm:$0xf] %v397
    %430 = vst [vmem:[%s3 + $0x1c] sm:$0xf] %v398
    %431 = vst [vmem:[%s3 + $0x20] sm:$0xf] %v399
    %432 = vst [vmem:[%s3 + $0x24] sm:$0xf] %v400
    %433 = vst [vmem:[%s3 + $0x28] sm:$0xf] %v401
    %434 = vst [vmem:[%s3 + $0x2c] sm:$0xf] %v402
    %435 = vst [vmem:[%s3 + $0x30] sm:$0xf] %v403
    %436 = vst [vmem:[%s3 + $0x34] sm:$0xf] %v404
    %437 = vst [vmem:[%s3 + $0x38] sm:$0xf] %v405
    %438 = vst [vmem:[%s3 + $0x3c] sm:$0xf] %v406
  $region21: #{sage_forward.8} parent=0 // pred_fallthru
    _
  // Predicated region
  $region22: #{sage_forward.8} parent=0 // pred_check
    _
  $region23: #{sage_forward.8} parent=0 // pred_check_branch
    %440 = sbr.rel (0) target = $region25
  $region24: #{sage_forward.8} parent=0 // pred_region
    _
  $region25: #{sage_forward.8} parent=0 // pred_fallthru
    _
  // Predicated region
  $region26: #{sage_forward.8} parent=0 // pred_check
    _
  $region27: #{sage_forward.8} parent=0 // pred_check_branch
    %442 = sbr.rel (0) target = $region29
  $region28: #{sage_forward.8} parent=0 // pred_region
    _
  $region29: #{sage_forward.8} parent=0 // pred_fallthru
    _

// kernel: sage_forward.13
$region0: #{sage_forward.13}
  #allocation0 [shape = 'u32[]', space=smem, size = 0x4, offset = 0x4, fixed_abs, tag = 'smem constant byte address 0x4 - core index']
  #allocation1 [shape = 'u32[144,128]{1,0:T(1,128)}', space=vmem, size = 0x12000, scoped, tag = 'internal scratch']
  #allocation2 [shape = 'f32[128,128]{1,0:T(8,128)}', space=vmem, size = 0x10000, scoped, tag = 'scratch operand']
  %s0 = inlined_call_operand.vmem [shape: bf16[128,128], index: 0, kind: input, shape index: {}]
  %s1 = inlined_call_operand.vmem [shape: bf16[128,128], index: 1, kind: input, shape index: {}]
  %s2 = inlined_call_operand.vmem [shape: f32[128,128], index: 2, kind: input, shape index: {}]
  %s3 = inlined_call_operand.vmem [shape: f32[128,128], index: 3, kind: output, shape index: {}]
  %s4 = sld [smem:[#allocation0]]
  $region30: #{sage_forward.13} parent=0
    _
  %s6 = ssub.s32 1, %s4
  %s7 = scalar_select 0, %s6, %s4
  // Predicated region
  $region2: #{sage_forward.13} parent=0 // pred_check
    _
  $region3: #{sage_forward.13} parent=0 // pred_check_branch
    %9 = sbr.rel (0) target = $region5
  $region4: #{sage_forward.13} parent=0 // pred_region
    _
  $region5: #{sage_forward.13} parent=0 // pred_fallthru
    _
  // Predicated region
  $region6: #{sage_forward.13} parent=0 // pred_check
    _
  $region7: #{sage_forward.13} parent=0 // pred_check_branch
    %11 = sbr.rel (0) target = $region9
  $region8: #{sage_forward.13} parent=0 // pred_region
    _
  $region9: #{sage_forward.13} parent=0 // pred_fallthru
    _
  // Predicated region
  $region10: #{sage_forward.13} parent=0 // pred_check
    _
  $region11: #{sage_forward.13} parent=0 // pred_check_branch
    %13 = sbr.rel (0) target = $region13
  $region12: #{sage_forward.13} parent=0 // pred_region
    _
  $region13: #{sage_forward.13} parent=0 // pred_fallthru
    _
  %p15 = scmp.eq.s32.totalorder 0, 0
  // Predicated region
  $region14: #{sage_forward.13} parent=0 // pred_check
    %p16 = pneg %p15
  $region15: #{sage_forward.13} parent=0 // pred_check_branch
    %18 = sbr.rel (%p16) target = $region17
  $region16: #{sage_forward.13} parent=0 // pred_region
    %v19 = vld [vmem:[%s2] sm:$0xff]
    %v20 = vld [vmem:[%s2 + $0x8] sm:$0xff]
    %v21 = vld [vmem:[%s2 + $0x10] sm:$0xff]
    %v22 = vld [vmem:[%s2 + $0x18] sm:$0xff]
    %v23 = vld [vmem:[%s2 + $0x20] sm:$0xff]
    %v24 = vld [vmem:[%s2 + $0x28] sm:$0xff]
    %v25 = vld [vmem:[%s2 + $0x30] sm:$0xff]
    %v26 = vld [vmem:[%s2 + $0x38] sm:$0xff]
    %v27 = vld [vmem:[%s2 + $0x40] sm:$0xff]
    %v28 = vld [vmem:[%s2 + $0x48] sm:$0xff]
    %v29 = vld [vmem:[%s2 + $0x50] sm:$0xff]
    %v30 = vld [vmem:[%s2 + $0x58] sm:$0xff]
    %v31 = vld [vmem:[%s2 + $0x60] sm:$0xff]
    %v32 = vld [vmem:[%s2 + $0x68] sm:$0xff]
    %v33 = vld [vmem:[%s2 + $0x70] sm:$0xff]
    %v34 = vld [vmem:[%s2 + $0x78] sm:$0xff]
    %35 = vst [vmem:[#allocation2] sm:$0xff] %v19
    %36 = vst [vmem:[#allocation2 + $0x8] sm:$0xff] %v20
    %37 = vst [vmem:[#allocation2 + $0x10] sm:$0xff] %v21
    %38 = vst [vmem:[#allocation2 + $0x18] sm:$0xff] %v22
    %39 = vst [vmem:[#allocation2 + $0x20] sm:$0xff] %v23
    %40 = vst [vmem:[#allocation2 + $0x28] sm:$0xff] %v24
    %41 = vst [vmem:[#allocation2 + $0x30] sm:$0xff] %v25
    %42 = vst [vmem:[#allocation2 + $0x38] sm:$0xff] %v26
    %43 = vst [vmem:[#allocation2 + $0x40] sm:$0xff] %v27
    %44 = vst [vmem:[#allocation2 + $0x48] sm:$0xff] %v28
    %45 = vst [vmem:[#allocation2 + $0x50] sm:$0xff] %v29
    %46 = vst [vmem:[#allocation2 + $0x58] sm:$0xff] %v30
    %47 = vst [vmem:[#allocation2 + $0x60] sm:$0xff] %v31
    %48 = vst [vmem:[#allocation2 + $0x68] sm:$0xff] %v32
    %49 = vst [vmem:[#allocation2 + $0x70] sm:$0xff] %v33
    %50 = vst [vmem:[#allocation2 + $0x78] sm:$0xff] %v34
  $region17: #{sage_forward.13} parent=0 // pred_fallthru
    _
  %v51 = vld [vmem:[#allocation2] sm:$0xff]
  %v52 = vld [vmem:[#allocation2 + $0x8] sm:$0xff]
  %v53 = vld [vmem:[#allocation2 + $0x10] sm:$0xff]
  %v54 = vld [vmem:[#allocation2 + $0x18] sm:$0xff]
  %v55 = vld [vmem:[#allocation2 + $0x20] sm:$0xff]
  %v56 = vld [vmem:[#allocation2 + $0x28] sm:$0xff]
  %v57 = vld [vmem:[#allocation2 + $0x30] sm:$0xff]
  %v58 = vld [vmem:[#allocation2 + $0x38] sm:$0xff]
  %v59 = vld [vmem:[#allocation2 + $0x40] sm:$0xff]
  %v60 = vld [vmem:[#allocation2 + $0x48] sm:$0xff]
  %v61 = vld [vmem:[#allocation2 + $0x50] sm:$0xff]
  %v62 = vld [vmem:[#allocation2 + $0x58] sm:$0xff]
  %v63 = vld [vmem:[#allocation2 + $0x60] sm:$0xff]
  %v64 = vld [vmem:[#allocation2 + $0x68] sm:$0xff]
  %v65 = vld [vmem:[#allocation2 + $0x70] sm:$0xff]
  %v66 = vld [vmem:[#allocation2 + $0x78] sm:$0xff]
  %v67 = vld [vmem:[%s0] sm:$0xf]
  %v68 = vld [vmem:[%s0 + $0x4] sm:$0xf]
  %v69 = vld [vmem:[%s0 + $0x8] sm:$0xf]
  %v70 = vld [vmem:[%s0 + $0xc] sm:$0xf]
  %v71 = vld [vmem:[%s0 + $0x10] sm:$0xf]
  %v72 = vld [vmem:[%s0 + $0x14] sm:$0xf]
  %v73 = vld [vmem:[%s0 + $0x18] sm:$0xf]
  %v74 = vld [vmem:[%s0 + $0x1c] sm:$0xf]
  %v75 = vld [vmem:[%s0 + $0x20] sm:$0xf]
  %v76 = vld [vmem:[%s0 + $0x24] sm:$0xf]
  %v77 = vld [vmem:[%s0 + $0x28] sm:$0xf]
  %v78 = vld [vmem:[%s0 + $0x2c] sm:$0xf]
  %v79 = vld [vmem:[%s0 + $0x30] sm:$0xf]
  %v80 = vld [vmem:[%s0 + $0x34] sm:$0xf]
  %v81 = vld [vmem:[%s0 + $0x38] sm:$0xf]
  %v82 = vld [vmem:[%s0 + $0x3c] sm:$0xf]
  %v83 = vld [vmem:[%s1] sm:$0xf]
  %v84 = vld [vmem:[%s1 + $0x4] sm:$0xf]
  %v85 = vld [vmem:[%s1 + $0x8] sm:$0xf]
  %v86 = vld [vmem:[%s1 + $0xc] sm:$0xf]
  %v87 = vld [vmem:[%s1 + $0x10] sm:$0xf]
  %v88 = vld [vmem:[%s1 + $0x14] sm:$0xf]
  %v89 = vld [vmem:[%s1 + $0x18] sm:$0xf]
  %v90 = vld [vmem:[%s1 + $0x1c] sm:$0xf]
  %v91 = vld [vmem:[%s1 + $0x20] sm:$0xf]
  %v92 = vld [vmem:[%s1 + $0x24] sm:$0xf]
  %v93 = vld [vmem:[%s1 + $0x28] sm:$0xf]
  %v94 = vld [vmem:[%s1 + $0x2c] sm:$0xf]
  %v95 = vld [vmem:[%s1 + $0x30] sm:$0xf]
  %v96 = vld [vmem:[%s1 + $0x34] sm:$0xf]
  %v97 = vld [vmem:[%s1 + $0x38] sm:$0xf]
  %v98 = vld [vmem:[%s1 + $0x3c] sm:$0xf]
  %v115 = vunpack.c.l.b16 %v67
  %v116 = vunpack.c.l.b16 %v68
  %v117 = vunpack.c.l.b16 %v69
  %v118 = vunpack.c.l.b16 %v70
  %v119 = vunpack.c.l.b16 %v71
  %v120 = vunpack.c.l.b16 %v72
  %v121 = vunpack.c.l.b16 %v73
  %v122 = vunpack.c.l.b16 %v74
  %v123 = vunpack.c.l.b16 %v75
  %v124 = vunpack.c.l.b16 %v76
  %v125 = vunpack.c.l.b16 %v77
  %v126 = vunpack.c.l.b16 %v78
  %v127 = vunpack.c.l.b16 %v79
  %v128 = vunpack.c.l.b16 %v80
  %v129 = vunpack.c.l.b16 %v81
  %v130 = vunpack.c.l.b16 %v82
  %v131 = vpack.c.b16 %v116, %v115
  %v132 = vpack.c.b16 %v118, %v117
  %v133 = vpack.c.b16 %v120, %v119
  %v134 = vpack.c.b16 %v122, %v121
  %v135 = vpack.c.b16 %v124, %v123
  %v136 = vpack.c.b16 %v126, %v125
  %v137 = vpack.c.b16 %v128, %v127
  %v138 = vpack.c.b16 %v130, %v129
  %v163 = vunpack.c.l.b16 %v83
  %v164 = vunpack.c.l.b16 %v84
  %v165 = vunpack.c.l.b16 %v85
  %v166 = vunpack.c.l.b16 %v86
  %v167 = vunpack.c.l.b16 %v87
  %v168 = vunpack.c.l.b16 %v88
  %v169 = vunpack.c.l.b16 %v89
  %v170 = vunpack.c.l.b16 %v90
  %v171 = vunpack.c.l.b16 %v91
  %v172 = vunpack.c.l.b16 %v92
  %v173 = vunpack.c.l.b16 %v93
  %v174 = vunpack.c.l.b16 %v94
  %v175 = vunpack.c.l.b16 %v95
  %v176 = vunpack.c.l.b16 %v96
  %v177 = vunpack.c.l.b16 %v97
  %v178 = vunpack.c.l.b16 %v98
  %v179 = vpack.c.b16 %v164, %v163
  %v180 = vpack.c.b16 %v166, %v165
  %v181 = vpack.c.b16 %v168, %v167
  %v182 = vpack.c.b16 %v170, %v169
  %v183 = vpack.c.b16 %v172, %v171
  %v184 = vpack.c.b16 %v174, %v173
  %v185 = vpack.c.b16 %v176, %v175
  %v186 = vpack.c.b16 %v178, %v177
  %195 = vmatprep.subr.bf16.mxu0 0
  %196 = vmatpush1.bf16.msra.mxu0 %v179
  %197 = vmatprep.subr.bf16.mxu0 0
  %198 = vmatpush1.bf16.msra.mxu0 %v180
  %199 = vmatprep.subr.bf16.mxu0 0
  %200 = vmatpush1.bf16.msra.mxu0 %v181
  %201 = vmatprep.subr.bf16.mxu0 0
  %202 = vmatpush1.bf16.msra.mxu0 %v182
  %203 = vmatprep.subr.bf16.mxu0 0
  %204 = vmatpush1.bf16.msra.mxu0 %v183
  %205 = vmatprep.subr.bf16.mxu0 0
  %206 = vmatpush1.bf16.msra.mxu0 %v184
  %207 = vmatprep.subr.bf16.mxu0 0
  %208 = vmatpush1.bf16.msra.mxu0 %v185
  %209 = vmatprep.subr.bf16.mxu0 0
  %210 = vmatpush1.bf16.msra.mxu0 %v186
  %211 = vmatprep.subr.bf16.mxu0 0
  %212 = vmatpush1.bf16.msra.mxu0 0
  %213 = vmatprep.subr.bf16.mxu0 0
  %214 = vmatpush1.bf16.msra.mxu0 0
  %215 = vmatprep.subr.bf16.mxu0 0
  %216 = vmatpush1.bf16.msra.mxu0 0
  %217 = vmatprep.subr.bf16.mxu0 0
  %218 = vmatpush1.bf16.msra.mxu0 0
  %219 = vmatprep.subr.bf16.mxu0 0
  %220 = vmatpush1.bf16.msra.mxu0 0
  %221 = vmatprep.subr.bf16.mxu0 0
  %222 = vmatpush1.bf16.msra.mxu0 0
  %223 = vmatprep.subr.bf16.mxu0 0
  %224 = vmatpush1.bf16.msra.mxu0 0
  %225 = vmatprep.subr.bf16.mxu0 0
  %226 = vmatpush1.bf16.msra.mxu0 0
  %227 = vmatprep.mubr.bf16.mxu0 0
  %228 = vmatmul.mubr.bf16.gmra.mrb[0].mxu0 %v131
  %v229 = vpop.f32.mrb[0].mxu0
  %v230 = vadd.f32 0.0, %v229
  %v231 = vpop.f32.mrb[0].mxu0
  %v232 = vpop.f32.mrb[0].mxu0
  %v233 = vadd.f32 0.0, %v232
  %v234 = vpop.f32.mrb[0].mxu0
  %235 = vmatprep.mubr.bf16.mxu0 0
  %236 = vmatmul.mubr.bf16.gmra.mrb[0].mxu0 %v132
  %v237 = vpop.f32.mrb[0].mxu0
  %v238 = vadd.f32 0.0, %v237
  %v239 = vpop.f32.mrb[0].mxu0
  %v240 = vpop.f32.mrb[0].mxu0
  %v241 = vadd.f32 0.0, %v240
  %v242 = vpop.f32.mrb[0].mxu0
  %243 = vmatprep.mubr.bf16.mxu0 0
  %244 = vmatmul.mubr.bf16.gmra.mrb[0].mxu0 %v133
  %v245 = vpop.f32.mrb[0].mxu0
  %v246 = vadd.f32 0.0, %v245
  %v247 = vpop.f32.mrb[0].mxu0
  %v248 = vpop.f32.mrb[0].mxu0
  %v249 = vadd.f32 0.0, %v248
  %v250 = vpop.f32.mrb[0].mxu0
  %251 = vmatprep.mubr.bf16.mxu0 0
  %252 = vmatmul.mubr.bf16.gmra.mrb[0].mxu0 %v134
  %v253 = vpop.f32.mrb[0].mxu0
  %v254 = vadd.f32 0.0, %v253
  %v255 = vpop.f32.mrb[0].mxu0
  %v256 = vpop.f32.mrb[0].mxu0
  %v257 = vadd.f32 0.0, %v256
  %v258 = vpop.f32.mrb[0].mxu0
  %259 = vmatprep.mubr.bf16.mxu0 0
  %260 = vmatmul.mubr.bf16.gmra.mrb[0].mxu0 %v135
  %v261 = vpop.f32.mrb[0].mxu0
  %v262 = vadd.f32 0.0, %v261
  %v263 = vpop.f32.mrb[0].mxu0
  %v264 = vpop.f32.mrb[0].mxu0
  %v265 = vadd.f32 0.0, %v264
  %v266 = vpop.f32.mrb[0].mxu0
  %267 = vmatprep.mubr.bf16.mxu0 0
  %268 = vmatmul.mubr.bf16.gmra.mrb[0].mxu0 %v136
  %v269 = vpop.f32.mrb[0].mxu0
  %v270 = vadd.f32 0.0, %v269
  %v271 = vpop.f32.mrb[0].mxu0
  %v272 = vpop.f32.mrb[0].mxu0
  %v273 = vadd.f32 0.0, %v272
  %v274 = vpop.f32.mrb[0].mxu0
  %275 = vmatprep.mubr.bf16.mxu0 0
  %276 = vmatmul.mubr.bf16.gmra.mrb[0].mxu0 %v137
  %v277 = vpop.f32.mrb[0].mxu0
  %v278 = vadd.f32 0.0, %v277
  %v279 = vpop.f32.mrb[0].mxu0
  %v280 = vpop.f32.mrb[0].mxu0
  %v281 = vadd.f32 0.0, %v280
  %v282 = vpop.f32.mrb[0].mxu0
  %283 = vmatprep.mubr.bf16.mxu0 0
  %284 = vmatmul.mubr.bf16.gmra.mrb[0].mxu0 %v138
  %v285 = vpop.f32.mrb[0].mxu0
  %v286 = vadd.f32 0.0, %v285
  %v287 = vpop.f32.mrb[0].mxu0
  %v288 = vpop.f32.mrb[0].mxu0
  %v289 = vadd.f32 0.0, %v288
  %v290 = vpop.f32.mrb[0].mxu0
  %291 = vdwg.mxu0
  %v292 = vadd.f32 %v51, %v230
  %v293 = vadd.f32 %v52, %v233
  %v294 = vadd.f32 %v53, %v238
  %v295 = vadd.f32 %v54, %v241
  %v296 = vadd.f32 %v55, %v246
  %v297 = vadd.f32 %v56, %v249
  %v298 = vadd.f32 %v57, %v254
  %v299 = vadd.f32 %v58, %v257
  %v300 = vadd.f32 %v59, %v262
  %v301 = vadd.f32 %v60, %v265
  %v302 = vadd.f32 %v61, %v270
  %v303 = vadd.f32 %v62, %v273
  %v304 = vadd.f32 %v63, %v278
  %v305 = vadd.f32 %v64, %v281
  %v306 = vadd.f32 %v65, %v286
  %v307 = vadd.f32 %v66, %v289
  %308 = vst [vmem:[#allocation2] sm:$0xff] %v292
  %309 = vst [vmem:[#allocation2 + $0x8] sm:$0xff] %v293
  %310 = vst [vmem:[#allocation2 + $0x10] sm:$0xff] %v294
  %311 = vst [vmem:[#allocation2 + $0x18] sm:$0xff] %v295
  %312 = vst [vmem:[#allocation2 + $0x20] sm:$0xff] %v296
  %313 = vst [vmem:[#allocation2 + $0x28] sm:$0xff] %v297
  %314 = vst [vmem:[#allocation2 + $0x30] sm:$0xff] %v298
  %315 = vst [vmem:[#allocation2 + $0x38] sm:$0xff] %v299
  %316 = vst [vmem:[#allocation2 + $0x40] sm:$0xff] %v300
  %317 = vst [vmem:[#allocation2 + $0x48] sm:$0xff] %v301
  %318 = vst [vmem:[#allocation2 + $0x50] sm:$0xff] %v302
  %319 = vst [vmem:[#allocation2 + $0x58] sm:$0xff] %v303
  %320 = vst [vmem:[#allocation2 + $0x60] sm:$0xff] %v304
  %321 = vst [vmem:[#allocation2 + $0x68] sm:$0xff] %v305
  %322 = vst [vmem:[#allocation2 + $0x70] sm:$0xff] %v306
  %323 = vst [vmem:[#allocation2 + $0x78] sm:$0xff] %v307
  // Predicated region
  $region18: #{sage_forward.13} parent=0 // pred_check
    %p324 = pneg %p15
  $region19: #{sage_forward.13} parent=0 // pred_check_branch
    %326 = sbr.rel (%p324) target = $region21
  $region20: #{sage_forward.13} parent=0 // pred_region
    %v327 = vld [vmem:[#allocation2] sm:$0xff]
    %v328 = vld [vmem:[#allocation2 + $0x8] sm:$0xff]
    %v329 = vld [vmem:[#allocation2 + $0x10] sm:$0xff]
    %v330 = vld [vmem:[#allocation2 + $0x18] sm:$0xff]
    %v331 = vld [vmem:[#allocation2 + $0x20] sm:$0xff]
    %v332 = vld [vmem:[#allocation2 + $0x28] sm:$0xff]
    %v333 = vld [vmem:[#allocation2 + $0x30] sm:$0xff]
    %v334 = vld [vmem:[#allocation2 + $0x38] sm:$0xff]
    %v335 = vld [vmem:[#allocation2 + $0x40] sm:$0xff]
    %v336 = vld [vmem:[#allocation2 + $0x48] sm:$0xff]
    %v337 = vld [vmem:[#allocation2 + $0x50] sm:$0xff]
    %v338 = vld [vmem:[#allocation2 + $0x58] sm:$0xff]
    %v339 = vld [vmem:[#allocation2 + $0x60] sm:$0xff]
    %v340 = vld [vmem:[#allocation2 + $0x68] sm:$0xff]
    %v341 = vld [vmem:[#allocation2 + $0x70] sm:$0xff]
    %v342 = vld [vmem:[#allocation2 + $0x78] sm:$0xff]
    %343 = vst [vmem:[%s3] sm:$0xff] %v327
    %344 = vst [vmem:[%s3 + $0x8] sm:$0xff] %v328
    %345 = vst [vmem:[%s3 + $0x10] sm:$0xff] %v329
    %346 = vst [vmem:[%s3 + $0x18] sm:$0xff] %v330
    %347 = vst [vmem:[%s3 + $0x20] sm:$0xff] %v331
    %348 = vst [vmem:[%s3 + $0x28] sm:$0xff] %v332
    %349 = vst [vmem:[%s3 + $0x30] sm:$0xff] %v333
    %350 = vst [vmem:[%s3 + $0x38] sm:$0xff] %v334
    %351 = vst [vmem:[%s3 + $0x40] sm:$0xff] %v335
    %352 = vst [vmem:[%s3 + $0x48] sm:$0xff] %v336
    %353 = vst [vmem:[%s3 + $0x50] sm:$0xff] %v337
    %354 = vst [vmem:[%s3 + $0x58] sm:$0xff] %v338
    %355 = vst [vmem:[%s3 + $0x60] sm:$0xff] %v339
    %356 = vst [vmem:[%s3 + $0x68] sm:$0xff] %v340
    %357 = vst [vmem:[%s3 + $0x70] sm:$0xff] %v341
    %358 = vst [vmem:[%s3 + $0x78] sm:$0xff] %v342
  $region21: #{sage_forward.13} parent=0 // pred_fallthru
    _
  // Predicated region
  $region22: #{sage_forward.13} parent=0 // pred_check
    _
  $region23: #{sage_forward.13} parent=0 // pred_check_branch
    %360 = sbr.rel (0) target = $region25
  $region24: #{sage_forward.13} parent=0 // pred_region
    _
  $region25: #{sage_forward.13} parent=0 // pred_fallthru
    _
  // Predicated region
  $region26: #{sage_forward.13} parent=0 // pred_check
    _
  $region27: #{sage_forward.13} parent=0 // pred_check_branch
    %362 = sbr.rel (0) target = $region29
  $region28: #{sage_forward.13} parent=0 // pred_region
    _
  $region29: #{sage_forward.13} parent=0 // pred_fallthru
    _

// kernel: sage_forward.7
$region0: #{sage_forward.7}
  #allocation0 [shape = 'u32[]', space=smem, size = 0x4, offset = 0x4, fixed_abs, tag = 'smem constant byte address 0x4 - core index']
  #allocation1 [shape = 'u32[144,128]{1,0:T(1,128)}', space=vmem, size = 0x12000, scoped, tag = 'internal scratch']
  %s0 = inlined_call_operand.vmem [shape: bf16[128,128], index: 0, kind: input, shape index: {}]
  %s1 = inlined_call_operand.vmem [shape: bf16[128,128], index: 1, kind: input, shape index: {}]
  %s2 = inlined_call_operand.vmem [shape: bf16[128,128], index: 2, kind: input, shape index: {}]
  %s3 = inlined_call_operand.vmem [shape: f32[1,128], index: 3, kind: input, shape index: {}]
  %s4 = inlined_call_operand.vmem [shape: bf16[128,128], index: 4, kind: output, shape index: {0}]
  %s5 = inlined_call_operand.vmem [shape: f32[128,128], index: 5, kind: output, shape index: {1}]
  %6 = xla_tuple %s4, %s5
  %s7 = sld [smem:[#allocation0]]
  $region34: #{sage_forward.7} parent=0
    _
  %s9 = ssub.s32 1, %s7
  %s10 = scalar_select 0, %s9, %s7
  // Predicated region
  $region2: #{sage_forward.7} parent=0 // pred_check
    _
  $region3: #{sage_forward.7} parent=0 // pred_check_branch
    %12 = sbr.rel (0) target = $region5
  $region4: #{sage_forward.7} parent=0 // pred_region
    _
  $region5: #{sage_forward.7} parent=0 // pred_fallthru
    _
  // Predicated region
  $region6: #{sage_forward.7} parent=0 // pred_check
    _
  $region7: #{sage_forward.7} parent=0 // pred_check_branch
    %14 = sbr.rel (0) target = $region9
  $region8: #{sage_forward.7} parent=0 // pred_region
    _
  $region9: #{sage_forward.7} parent=0 // pred_fallthru
    _
  // Predicated region
  $region10: #{sage_forward.7} parent=0 // pred_check
    _
  $region11: #{sage_forward.7} parent=0 // pred_check_branch
    %16 = sbr.rel (0) target = $region13
  $region12: #{sage_forward.7} parent=0 // pred_region
    _
  $region13: #{sage_forward.7} parent=0 // pred_fallthru
    _
  // Predicated region
  $region14: #{sage_forward.7} parent=0 // pred_check
    _
  $region15: #{sage_forward.7} parent=0 // pred_check_branch
    %18 = sbr.rel (0) target = $region17
  $region16: #{sage_forward.7} parent=0 // pred_region
    _
  $region17: #{sage_forward.7} parent=0 // pred_fallthru
    _
  %v20 = vld [vmem:[%s0] sm:$0xf]
  %v21 = vld [vmem:[%s0 + $0x4] sm:$0xf]
  %v22 = vld [vmem:[%s0 + $0x8] sm:$0xf]
  %v23 = vld [vmem:[%s0 + $0xc] sm:$0xf]
  %v24 = vld [vmem:[%s0 + $0x10] sm:$0xf]
  %v25 = vld [vmem:[%s0 + $0x14] sm:$0xf]
  %v26 = vld [vmem:[%s0 + $0x18] sm:$0xf]
  %v27 = vld [vmem:[%s0 + $0x1c] sm:$0xf]
  %v28 = vld [vmem:[%s0 + $0x20] sm:$0xf]
  %v29 = vld [vmem:[%s0 + $0x24] sm:$0xf]
  %v30 = vld [vmem:[%s0 + $0x28] sm:$0xf]
  %v31 = vld [vmem:[%s0 + $0x2c] sm:$0xf]
  %v32 = vld [vmem:[%s0 + $0x30] sm:$0xf]
  %v33 = vld [vmem:[%s0 + $0x34] sm:$0xf]
  %v34 = vld [vmem:[%s0 + $0x38] sm:$0xf]
  %v35 = vld [vmem:[%s0 + $0x3c] sm:$0xf]
  %v36 = vld [vmem:[%s1] sm:$0xf]
  %v37 = vld [vmem:[%s1 + $0x4] sm:$0xf]
  %v38 = vld [vmem:[%s1 + $0x8] sm:$0xf]
  %v39 = vld [vmem:[%s1 + $0xc] sm:$0xf]
  %v40 = vld [vmem:[%s1 + $0x10] sm:$0xf]
  %v41 = vld [vmem:[%s1 + $0x14] sm:$0xf]
  %v42 = vld [vmem:[%s1 + $0x18] sm:$0xf]
  %v43 = vld [vmem:[%s1 + $0x1c] sm:$0xf]
  %v44 = vld [vmem:[%s1 + $0x20] sm:$0xf]
  %v45 = vld [vmem:[%s1 + $0x24] sm:$0xf]
  %v46 = vld [vmem:[%s1 + $0x28] sm:$0xf]
  %v47 = vld [vmem:[%s1 + $0x2c] sm:$0xf]
  %v48 = vld [vmem:[%s1 + $0x30] sm:$0xf]
  %v49 = vld [vmem:[%s1 + $0x34] sm:$0xf]
  %v50 = vld [vmem:[%s1 + $0x38] sm:$0xf]
  %v51 = vld [vmem:[%s1 + $0x3c] sm:$0xf]
  %v68 = vunpack.c.l.b16 %v20
  %v69 = vunpack.c.l.b16 %v21
  %v70 = vunpack.c.l.b16 %v22
  %v71 = vunpack.c.l.b16 %v23
  %v72 = vunpack.c.l.b16 %v24
  %v73 = vunpack.c.l.b16 %v25
  %v74 = vunpack.c.l.b16 %v26
  %v75 = vunpack.c.l.b16 %v27
  %v76 = vunpack.c.l.b16 %v28
  %v77 = vunpack.c.l.b16 %v29
  %v78 = vunpack.c.l.b16 %v30
  %v79 = vunpack.c.l.b16 %v31
  %v80 = vunpack.c.l.b16 %v32
  %v81 = vunpack.c.l.b16 %v33
  %v82 = vunpack.c.l.b16 %v34
  %v83 = vunpack.c.l.b16 %v35
  %v84 = vpack.c.b16 %v69, %v68
  %v85 = vpack.c.b16 %v71, %v70
  %v86 = vpack.c.b16 %v73, %v72
  %v87 = vpack.c.b16 %v75, %v74
  %v88 = vpack.c.b16 %v77, %v76
  %v89 = vpack.c.b16 %v79, %v78
  %v90 = vpack.c.b16 %v81, %v80
  %v91 = vpack.c.b16 %v83, %v82
  %v116 = vunpack.c.l.b16 %v36
  %v117 = vunpack.c.l.b16 %v37
  %v118 = vunpack.c.l.b16 %v38
  %v119 = vunpack.c.l.b16 %v39
  %v120 = vunpack.c.l.b16 %v40
  %v121 = vunpack.c.l.b16 %v41
  %v122 = vunpack.c.l.b16 %v42
  %v123 = vunpack.c.l.b16 %v43
  %v124 = vunpack.c.l.b16 %v44
  %v125 = vunpack.c.l.b16 %v45
  %v126 = vunpack.c.l.b16 %v46
  %v127 = vunpack.c.l.b16 %v47
  %v128 = vunpack.c.l.b16 %v48
  %v129 = vunpack.c.l.b16 %v49
  %v130 = vunpack.c.l.b16 %v50
  %v131 = vunpack.c.l.b16 %v51
  %v132 = vpack.c.b16 %v117, %v116
  %v133 = vpack.c.b16 %v119, %v118
  %v134 = vpack.c.b16 %v121, %v120
  %v135 = vpack.c.b16 %v123, %v122
  %v136 = vpack.c.b16 %v125, %v124
  %v137 = vpack.c.b16 %v127, %v126
  %v138 = vpack.c.b16 %v129, %v128
  %v139 = vpack.c.b16 %v131, %v130
  %148 = vmatprep.subr.bf16.mxu0 0
  %149 = vmatpush1.bf16.msra.mxu0 %v132
  %150 = vmatprep.subr.bf16.mxu0 0
  %151 = vmatpush1.bf16.msra.mxu0 %v133
  %152 = vmatprep.subr.bf16.mxu0 0
  %153 = vmatpush1.bf16.msra.mxu0 %v134
  %154 = vmatprep.subr.bf16.mxu0 0
  %155 = vmatpush1.bf16.msra.mxu0 %v135
  %156 = vmatprep.subr.bf16.mxu0 0
  %157 = vmatpush1.bf16.msra.mxu0 %v136
  %158 = vmatprep.subr.bf16.mxu0 0
  %159 = vmatpush1.bf16.msra.mxu0 %v137
  %160 = vmatprep.subr.bf16.mxu0 0
  %161 = vmatpush1.bf16.msra.mxu0 %v138
  %162 = vmatprep.subr.bf16.mxu0 0
  %163 = vmatpush1.bf16.msra.mxu0 %v139
  %164 = vmatprep.subr.bf16.mxu0 0
  %165 = vmatpush1.bf16.msra.mxu0 0
  %166 = vmatprep.subr.bf16.mxu0 0
  %167 = vmatpush1.bf16.msra.mxu0 0
  %168 = vmatprep.subr.bf16.mxu0 0
  %169 = vmatpush1.bf16.msra.mxu0 0
  %170 = vmatprep.subr.bf16.mxu0 0
  %171 = vmatpush1.bf16.msra.mxu0 0
  %172 = vmatprep.subr.bf16.mxu0 0
  %173 = vmatpush1.bf16.msra.mxu0 0
  %174 = vmatprep.subr.bf16.mxu0 0
  %175 = vmatpush1.bf16.msra.mxu0 0
  %176 = vmatprep.subr.bf16.mxu0 0
  %177 = vmatpush1.bf16.msra.mxu0 0
  %178 = vmatprep.subr.bf16.mxu0 0
  %179 = vmatpush1.bf16.msra.mxu0 0
  %180 = vmatprep.mubr.bf16.mxu0 0
  %181 = vmatmul.mubr.bf16.gmra.mrb[0].mxu0 %v84
  %v182 = vpop.f32.mrb[0].mxu0
  %v183 = vadd.f32 0.0, %v182
  %v184 = vpop.f32.mrb[0].mxu0
  %v185 = vpop.f32.mrb[0].mxu0
  %v186 = vadd.f32 0.0, %v185
  %v187 = vpop.f32.mrb[0].mxu0
  %188 = vmatprep.mubr.bf16.mxu0 0
  %189 = vmatmul.mubr.bf16.gmra.mrb[0].mxu0 %v85
  %v190 = vpop.f32.mrb[0].mxu0
  %v191 = vadd.f32 0.0, %v190
  %v192 = vpop.f32.mrb[0].mxu0
  %v193 = vpop.f32.mrb[0].mxu0
  %v194 = vadd.f32 0.0, %v193
  %v195 = vpop.f32.mrb[0].mxu0
  %196 = vmatprep.mubr.bf16.mxu0 0
  %197 = vmatmul.mubr.bf16.gmra.mrb[0].mxu0 %v86
  %v198 = vpop.f32.mrb[0].mxu0
  %v199 = vadd.f32 0.0, %v198
  %v200 = vpop.f32.mrb[0].mxu0
  %v201 = vpop.f32.mrb[0].mxu0
  %v202 = vadd.f32 0.0, %v201
  %v203 = vpop.f32.mrb[0].mxu0
  %204 = vmatprep.mubr.bf16.mxu0 0
  %205 = vmatmul.mubr.bf16.gmra.mrb[0].mxu0 %v87
  %v206 = vpop.f32.mrb[0].mxu0
  %v207 = vadd.f32 0.0, %v206
  %v208 = vpop.f32.mrb[0].mxu0
  %v209 = vpop.f32.mrb[0].mxu0
  %v210 = vadd.f32 0.0, %v209
  %v211 = vpop.f32.mrb[0].mxu0
  %212 = vmatprep.mubr.bf16.mxu0 0
  %213 = vmatmul.mubr.bf16.gmra.mrb[0].mxu0 %v88
  %v214 = vpop.f32.mrb[0].mxu0
  %v215 = vadd.f32 0.0, %v214
  %v216 = vpop.f32.mrb[0].mxu0
  %v217 = vpop.f32.mrb[0].mxu0
  %v218 = vadd.f32 0.0, %v217
  %v219 = vpop.f32.mrb[0].mxu0
  %220 = vmatprep.mubr.bf16.mxu0 0
  %221 = vmatmul.mubr.bf16.gmra.mrb[0].mxu0 %v89
  %v222 = vpop.f32.mrb[0].mxu0
  %v223 = vadd.f32 0.0, %v222
  %v224 = vpop.f32.mrb[0].mxu0
  %v225 = vpop.f32.mrb[0].mxu0
  %v226 = vadd.f32 0.0, %v225
  %v227 = vpop.f32.mrb[0].mxu0
  %228 = vmatprep.mubr.bf16.mxu0 0
  %229 = vmatmul.mubr.bf16.gmra.mrb[0].mxu0 %v90
  %v230 = vpop.f32.mrb[0].mxu0
  %v231 = vadd.f32 0.0, %v230
  %v232 = vpop.f32.mrb[0].mxu0
  %v233 = vpop.f32.mrb[0].mxu0
  %v234 = vadd.f32 0.0, %v233
  %v235 = vpop.f32.mrb[0].mxu0
  %236 = vmatprep.mubr.bf16.mxu0 0
  %237 = vmatmul.mubr.bf16.gmra.mrb[0].mxu0 %v91
  %v238 = vpop.f32.mrb[0].mxu0
  %v239 = vadd.f32 0.0, %v238
  %v240 = vpop.f32.mrb[0].mxu0
  %v241 = vpop.f32.mrb[0].mxu0
  %v242 = vadd.f32 0.0, %v241
  %v243 = vpop.f32.mrb[0].mxu0
  %244 = vdwg.mxu0
  %v245 = vpack.c.bf16 %v186, %v183
  %v246 = vpack.c.bf16 %v194, %v191
  %v247 = vpack.c.bf16 %v202, %v199
  %v248 = vpack.c.bf16 %v210, %v207
  %v249 = vpack.c.bf16 %v218, %v215
  %v250 = vpack.c.bf16 %v226, %v223
  %v251 = vpack.c.bf16 %v234, %v231
  %v252 = vpack.c.bf16 %v242, %v239
  %v261 = vunpack.c.l.b16 %v245
  %v262 = vunpack.c.h.b16 %v245
  %v263 = vunpack.c.l.b16 %v246
  %v264 = vunpack.c.h.b16 %v246
  %v265 = vunpack.c.l.b16 %v247
  %v266 = vunpack.c.h.b16 %v247
  %v267 = vunpack.c.l.b16 %v248
  %v268 = vunpack.c.h.b16 %v248
  %v269 = vunpack.c.l.b16 %v249
  %v270 = vunpack.c.h.b16 %v249
  %v271 = vunpack.c.l.b16 %v250
  %v272 = vunpack.c.h.b16 %v250
  %v273 = vunpack.c.l.b16 %v251
  %v274 = vunpack.c.h.b16 %v251
  %v275 = vunpack.c.l.b16 %v252
  %v276 = vunpack.c.h.b16 %v252
  %v277 = vpack.c.b16 %v261, %v261
  %v278 = vpack.c.b16 %v262, %v262
  %v279 = vpack.c.b16 %v263, %v263
  %v280 = vpack.c.b16 %v264, %v264
  %v281 = vpack.c.b16 %v265, %v265
  %v282 = vpack.c.b16 %v266, %v266
  %v283 = vpack.c.b16 %v267, %v267
  %v284 = vpack.c.b16 %v268, %v268
  %v285 = vpack.c.b16 %v269, %v269
  %v286 = vpack.c.b16 %v270, %v270
  %v287 = vpack.c.b16 %v271, %v271
  %v288 = vpack.c.b16 %v272, %v272
  %v289 = vpack.c.b16 %v273, %v273
  %v290 = vpack.c.b16 %v274, %v274
  %v291 = vpack.c.b16 %v275, %v275
  %v292 = vpack.c.b16 %v276, %v276
  %309 = vst [vmem:[%s4] sm:$0xf] %v277
  %310 = vst [vmem:[%s4 + $0x4] sm:$0xf] %v278
  %311 = vst [vmem:[%s4 + $0x8] sm:$0xf] %v279
  %312 = vst [vmem:[%s4 + $0xc] sm:$0xf] %v280
  %313 = vst [vmem:[%s4 + $0x10] sm:$0xf] %v281
  %314 = vst [vmem:[%s4 + $0x14] sm:$0xf] %v282
  %315 = vst [vmem:[%s4 + $0x18] sm:$0xf] %v283
  %316 = vst [vmem:[%s4 + $0x1c] sm:$0xf] %v284
  %317 = vst [vmem:[%s4 + $0x20] sm:$0xf] %v285
  %318 = vst [vmem:[%s4 + $0x24] sm:$0xf] %v286
  %319 = vst [vmem:[%s4 + $0x28] sm:$0xf] %v287
  %320 = vst [vmem:[%s4 + $0x2c] sm:$0xf] %v288
  %321 = vst [vmem:[%s4 + $0x30] sm:$0xf] %v289
  %322 = vst [vmem:[%s4 + $0x34] sm:$0xf] %v290
  %323 = vst [vmem:[%s4 + $0x38] sm:$0xf] %v291
  %324 = vst [vmem:[%s4 + $0x3c] sm:$0xf] %v292
  %v325 = vld [vmem:[%s2] sm:$0xf]
  %v326 = vld [vmem:[%s2 + $0x4] sm:$0xf]
  %v327 = vld [vmem:[%s2 + $0x8] sm:$0xf]
  %v328 = vld [vmem:[%s2 + $0xc] sm:$0xf]
  %v329 = vld [vmem:[%s2 + $0x10] sm:$0xf]
  %v330 = vld [vmem:[%s2 + $0x14] sm:$0xf]
  %v331 = vld [vmem:[%s2 + $0x18] sm:$0xf]
  %v332 = vld [vmem:[%s2 + $0x1c] sm:$0xf]
  %v333 = vld [vmem:[%s2 + $0x20] sm:$0xf]
  %v334 = vld [vmem:[%s2 + $0x24] sm:$0xf]
  %v335 = vld [vmem:[%s2 + $0x28] sm:$0xf]
  %v336 = vld [vmem:[%s2 + $0x2c] sm:$0xf]
  %v337 = vld [vmem:[%s2 + $0x30] sm:$0xf]
  %v338 = vld [vmem:[%s2 + $0x34] sm:$0xf]
  %v339 = vld [vmem:[%s2 + $0x38] sm:$0xf]
  %v340 = vld [vmem:[%s2 + $0x3c] sm:$0xf]
  %v341 = vld [vmem:[%s3] sm:$0x1]
  %v343 = vlaneseq
  %v344 = vshrl.u32 %v343, 7
  %v345 = vsub.s32 0, %v344
  %v346 = vrot.slane %v341, %v345
  %v364 = vunpack.c.l.b16 %v325
  %v365 = vunpack.c.l.b16 %v326
  %v366 = vunpack.c.l.b16 %v327
  %v367 = vunpack.c.l.b16 %v328
  %v368 = vunpack.c.l.b16 %v329
  %v369 = vunpack.c.l.b16 %v330
  %v370 = vunpack.c.l.b16 %v331
  %v371 = vunpack.c.l.b16 %v332
  %v372 = vunpack.c.l.b16 %v333
  %v373 = vunpack.c.l.b16 %v334
  %v374 = vunpack.c.l.b16 %v335
  %v375 = vunpack.c.l.b16 %v336
  %v376 = vunpack.c.l.b16 %v337
  %v377 = vunpack.c.l.b16 %v338
  %v378 = vunpack.c.l.b16 %v339
  %v379 = vunpack.c.l.b16 %v340
  %v380 = vpack.c.b16 %v365, %v364
  %v381 = vpack.c.b16 %v367, %v366
  %v382 = vpack.c.b16 %v369, %v368
  %v383 = vpack.c.b16 %v371, %v370
  %v384 = vpack.c.b16 %v373, %v372
  %v385 = vpack.c.b16 %v375, %v374
  %v386 = vpack.c.b16 %v377, %v376
  %v387 = vpack.c.b16 %v379, %v378
  %396 = vmatprep.subr.bf16.mxu0 0
  %397 = vmatpush1.bf16.msra.mxu0 %v380
  %398 = vmatprep.subr.bf16.mxu0 0
  %399 = vmatpush1.bf16.msra.mxu0 %v381
  %400 = vmatprep.subr.bf16.mxu0 0
  %401 = vmatpush1.bf16.msra.mxu0 %v382
  %402 = vmatprep.subr.bf16.mxu0 0
  %403 = vmatpush1.bf16.msra.mxu0 %v383
  %404 = vmatprep.subr.bf16.mxu0 0
  %405 = vmatpush1.bf16.msra.mxu0 %v384
  %406 = vmatprep.subr.bf16.mxu0 0
  %407 = vmatpush1.bf16.msra.mxu0 %v385
  %408 = vmatprep.subr.bf16.mxu0 0
  %409 = vmatpush1.bf16.msra.mxu0 %v386
  %410 = vmatprep.subr.bf16.mxu0 0
  %411 = vmatpush1.bf16.msra.mxu0 %v387
  %412 = vmatprep.subr.bf16.mxu0 0
  %413 = vmatpush1.bf16.msra.mxu0 0
  %414 = vmatprep.subr.bf16.mxu0 0
  %415 = vmatpush1.bf16.msra.mxu0 0
  %416 = vmatprep.subr.bf16.mxu0 0
  %417 = vmatpush1.bf16.msra.mxu0 0
  %418 = vmatprep.subr.bf16.mxu0 0
  %419 = vmatpush1.bf16.msra.mxu0 0
  %420 = vmatprep.subr.bf16.mxu0 0
  %421 = vmatpush1.bf16.msra.mxu0 0
  %422 = vmatprep.subr.bf16.mxu0 0
  %423 = vmatpush1.bf16.msra.mxu0 0
  %424 = vmatprep.subr.bf16.mxu0 0
  %425 = vmatpush1.bf16.msra.mxu0 0
  %426 = vmatprep.subr.bf16.mxu0 0
  %427 = vmatpush1.bf16.msra.mxu0 0
  %428 = vmatprep.mubr.bf16.mxu0 0
  %429 = vmatmul.mubr.bf16.gmra.mrb[0].mxu0 %v84
  %v430 = vpop.f32.mrb[0].mxu0
  %v431 = vadd.f32 %v346, %v430
  %v432 = vpop.f32.mrb[0].mxu0
  %v433 = vpop.f32.mrb[0].mxu0
  %v434 = vadd.f32 %v346, %v433
  %v435 = vpop.f32.mrb[0].mxu0
  %436 = vmatprep.mubr.bf16.mxu0 0
  %437 = vmatmul.mubr.bf16.gmra.mrb[0].mxu0 %v85
  %v438 = vpop.f32.mrb[0].mxu0
  %v439 = vadd.f32 %v346, %v438
  %v440 = vpop.f32.mrb[0].mxu0
  %v441 = vpop.f32.mrb[0].mxu0
  %v442 = vadd.f32 %v346, %v441
  %v443 = vpop.f32.mrb[0].mxu0
  %444 = vmatprep.mubr.bf16.mxu0 0
  %445 = vmatmul.mubr.bf16.gmra.mrb[0].mxu0 %v86
  %v446 = vpop.f32.mrb[0].mxu0
  %v447 = vadd.f32 %v346, %v446
  %v448 = vpop.f32.mrb[0].mxu0
  %v449 = vpop.f32.mrb[0].mxu0
  %v450 = vadd.f32 %v346, %v449
  %v451 = vpop.f32.mrb[0].mxu0
  %452 = vmatprep.mubr.bf16.mxu0 0
  %453 = vmatmul.mubr.bf16.gmra.mrb[0].mxu0 %v87
  %v454 = vpop.f32.mrb[0].mxu0
  %v455 = vadd.f32 %v346, %v454
  %v456 = vpop.f32.mrb[0].mxu0
  %v457 = vpop.f32.mrb[0].mxu0
  %v458 = vadd.f32 %v346, %v457
  %v459 = vpop.f32.mrb[0].mxu0
  %460 = vmatprep.mubr.bf16.mxu0 0
  %461 = vmatmul.mubr.bf16.gmra.mrb[0].mxu0 %v88
  %v462 = vpop.f32.mrb[0].mxu0
  %v463 = vadd.f32 %v346, %v462
  %v464 = vpop.f32.mrb[0].mxu0
  %v465 = vpop.f32.mrb[0].mxu0
  %v466 = vadd.f32 %v346, %v465
  %v467 = vpop.f32.mrb[0].mxu0
  %468 = vmatprep.mubr.bf16.mxu0 0
  %469 = vmatmul.mubr.bf16.gmra.mrb[0].mxu0 %v89
  %v470 = vpop.f32.mrb[0].mxu0
  %v471 = vadd.f32 %v346, %v470
  %v472 = vpop.f32.mrb[0].mxu0
  %v473 = vpop.f32.mrb[0].mxu0
  %v474 = vadd.f32 %v346, %v473
  %v475 = vpop.f32.mrb[0].mxu0
  %476 = vmatprep.mubr.bf16.mxu0 0
  %477 = vmatmul.mubr.bf16.gmra.mrb[0].mxu0 %v90
  %v478 = vpop.f32.mrb[0].mxu0
  %v479 = vadd.f32 %v346, %v478
  %v480 = vpop.f32.mrb[0].mxu0
  %v481 = vpop.f32.mrb[0].mxu0
  %v482 = vadd.f32 %v346, %v481
  %v483 = vpop.f32.mrb[0].mxu0
  %484 = vmatprep.mubr.bf16.mxu0 0
  %485 = vmatmul.mubr.bf16.gmra.mrb[0].mxu0 %v91
  %v486 = vpop.f32.mrb[0].mxu0
  %v487 = vadd.f32 %v346, %v486
  %v488 = vpop.f32.mrb[0].mxu0
  %v489 = vpop.f32.mrb[0].mxu0
  %v490 = vadd.f32 %v346, %v489
  %v491 = vpop.f32.mrb[0].mxu0
  %492 = vdwg.mxu0
  %493 = vst [vmem:[%s5] sm:$0xff] %v431
  %494 = vst [vmem:[%s5 + $0x8] sm:$0xff] %v434
  %495 = vst [vmem:[%s5 + $0x10] sm:$0xff] %v439
  %496 = vst [vmem:[%s5 + $0x18] sm:$0xff] %v442
  %497 = vst [vmem:[%s5 + $0x20] sm:$0xff] %v447
  %498 = vst [vmem:[%s5 + $0x28] sm:$0xff] %v450
  %499 = vst [vmem:[%s5 + $0x30] sm:$0xff] %v455
  %500 = vst [vmem:[%s5 + $0x38] sm:$0xff] %v458
  %501 = vst [vmem:[%s5 + $0x40] sm:$0xff] %v463
  %502 = vst [vmem:[%s5 + $0x48] sm:$0xff] %v466
  %503 = vst [vmem:[%s5 + $0x50] sm:$0xff] %v471
  %504 = vst [vmem:[%s5 + $0x58] sm:$0xff] %v474
  %505 = vst [vmem:[%s5 + $0x60] sm:$0xff] %v479
  %506 = vst [vmem:[%s5 + $0x68] sm:$0xff] %v482
  %507 = vst [vmem:[%s5 + $0x70] sm:$0xff] %v487
  %508 = vst [vmem:[%s5 + $0x78] sm:$0xff] %v490
  // Predicated region
  $region18: #{sage_forward.7} parent=0 // pred_check
    _
  $region19: #{sage_forward.7} parent=0 // pred_check_branch
    %510 = sbr.rel (0) target = $region21
  $region20: #{sage_forward.7} parent=0 // pred_region
    _
  $region21: #{sage_forward.7} parent=0 // pred_fallthru
    _
  // Predicated region
  $region22: #{sage_forward.7} parent=0 // pred_check
    _
  $region23: #{sage_forward.7} parent=0 // pred_check_branch
    %512 = sbr.rel (0) target = $region25
  $region24: #{sage_forward.7} parent=0 // pred_region
    _
  $region25: #{sage_forward.7} parent=0 // pred_fallthru
    _
  // Predicated region
  $region26: #{sage_forward.7} parent=0 // pred_check
    _
  $region27: #{sage_forward.7} parent=0 // pred_check_branch
    %514 = sbr.rel (0) target = $region29
  $region28: #{sage_forward.7} parent=0 // pred_region
    _
  $region29: #{sage_forward.7} parent=0 // pred_fallthru
    _
  // Predicated region
  $region30: #{sage_forward.7} parent=0 // pred_check
    _
  $region31: #{sage_forward.7} parent=0 // pred_check_branch
    %516 = sbr.rel (0) target = $region33
  $region32: #{sage_forward.7} parent=0 // pred_region
    _
  $region33: #{sage_forward.7} parent=0 // pred_fallthru
    _

// kernel: sage_forward.10
$region0: #{sage_forward.10}
  #allocation0 [shape = 'u32[]', space=smem, size = 0x4, offset = 0x4, fixed_abs, tag = 'smem constant byte address 0x4 - core index']
  #allocation1 [shape = 'u32[144,128]{1,0:T(1,128)}', space=vmem, size = 0x12000, scoped, tag = 'internal scratch']
  #allocation2 [shape = 'f32[128,128]{1,0:T(8,128)}', space=vmem, size = 0x10000, scoped, tag = 'scratch operand']
  %s0 = inlined_call_operand.vmem [shape: bf16[128,128], index: 0, kind: input, shape index: {}]
  %s1 = inlined_call_operand.vmem [shape: bf16[128,128], index: 1, kind: input, shape index: {}]
  %s2 = inlined_call_operand.vmem [shape: f32[128,128], index: 2, kind: input, shape index: {}]
  %s3 = inlined_call_operand.vmem [shape: bf16[128,128], index: 3, kind: output, shape index: {0}]
  %s4 = inlined_call_operand.vmem [shape: bf16[128,128], index: 4, kind: output, shape index: {1}]
  %5 = xla_tuple %s3, %s4
  %s6 = sld [smem:[#allocation0]]
  $region38: #{sage_forward.10} parent=0
    _
  %s8 = ssub.s32 1, %s6
  %s9 = scalar_select 0, %s8, %s6
  // Predicated region
  $region2: #{sage_forward.10} parent=0 // pred_check
    _
  $region3: #{sage_forward.10} parent=0 // pred_check_branch
    %11 = sbr.rel (0) target = $region5
  $region4: #{sage_forward.10} parent=0 // pred_region
    _
  $region5: #{sage_forward.10} parent=0 // pred_fallthru
    _
  // Predicated region
  $region6: #{sage_forward.10} parent=0 // pred_check
    _
  $region7: #{sage_forward.10} parent=0 // pred_check_branch
    %13 = sbr.rel (0) target = $region9
  $region8: #{sage_forward.10} parent=0 // pred_region
    _
  $region9: #{sage_forward.10} parent=0 // pred_fallthru
    _
  // Predicated region
  $region10: #{sage_forward.10} parent=0 // pred_check
    _
  $region11: #{sage_forward.10} parent=0 // pred_check_branch
    %15 = sbr.rel (0) target = $region13
  $region12: #{sage_forward.10} parent=0 // pred_region
    _
  $region13: #{sage_forward.10} parent=0 // pred_fallthru
    _
  %p17 = scmp.eq.s32.totalorder 0, 0
  // Predicated region
  $region14: #{sage_forward.10} parent=0 // pred_check
    %p18 = pneg %p17
  $region15: #{sage_forward.10} parent=0 // pred_check_branch
    %20 = sbr.rel (%p18) target = $region17
  $region16: #{sage_forward.10} parent=0 // pred_region
    %v21 = vld [vmem:[%s2] sm:$0xff]
    %v22 = vld [vmem:[%s2 + $0x8] sm:$0xff]
    %v23 = vld [vmem:[%s2 + $0x10] sm:$0xff]
    %v24 = vld [vmem:[%s2 + $0x18] sm:$0xff]
    %v25 = vld [vmem:[%s2 + $0x20] sm:$0xff]
    %v26 = vld [vmem:[%s2 + $0x28] sm:$0xff]
    %v27 = vld [vmem:[%s2 + $0x30] sm:$0xff]
    %v28 = vld [vmem:[%s2 + $0x38] sm:$0xff]
    %v29 = vld [vmem:[%s2 + $0x40] sm:$0xff]
    %v30 = vld [vmem:[%s2 + $0x48] sm:$0xff]
    %v31 = vld [vmem:[%s2 + $0x50] sm:$0xff]
    %v32 = vld [vmem:[%s2 + $0x58] sm:$0xff]
    %v33 = vld [vmem:[%s2 + $0x60] sm:$0xff]
    %v34 = vld [vmem:[%s2 + $0x68] sm:$0xff]
    %v35 = vld [vmem:[%s2 + $0x70] sm:$0xff]
    %v36 = vld [vmem:[%s2 + $0x78] sm:$0xff]
    %37 = vst [vmem:[#allocation2] sm:$0xff] %v21
    %38 = vst [vmem:[#allocation2 + $0x8] sm:$0xff] %v22
    %39 = vst [vmem:[#allocation2 + $0x10] sm:$0xff] %v23
    %40 = vst [vmem:[#allocation2 + $0x18] sm:$0xff] %v24
    %41 = vst [vmem:[#allocation2 + $0x20] sm:$0xff] %v25
    %42 = vst [vmem:[#allocation2 + $0x28] sm:$0xff] %v26
    %43 = vst [vmem:[#allocation2 + $0x30] sm:$0xff] %v27
    %44 = vst [vmem:[#allocation2 + $0x38] sm:$0xff] %v28
    %45 = vst [vmem:[#allocation2 + $0x40] sm:$0xff] %v29
    %46 = vst [vmem:[#allocation2 + $0x48] sm:$0xff] %v30
    %47 = vst [vmem:[#allocation2 + $0x50] sm:$0xff] %v31
    %48 = vst [vmem:[#allocation2 + $0x58] sm:$0xff] %v32
    %49 = vst [vmem:[#allocation2 + $0x60] sm:$0xff] %v33
    %50 = vst [vmem:[#allocation2 + $0x68] sm:$0xff] %v34
    %51 = vst [vmem:[#allocation2 + $0x70] sm:$0xff] %v35
    %52 = vst [vmem:[#allocation2 + $0x78] sm:$0xff] %v36
  $region17: #{sage_forward.10} parent=0 // pred_fallthru
    _
  %v53 = vld [vmem:[#allocation2] sm:$0xff]
  %v54 = vld [vmem:[#allocation2 + $0x8] sm:$0xff]
  %v55 = vld [vmem:[#allocation2 + $0x10] sm:$0xff]
  %v56 = vld [vmem:[#allocation2 + $0x18] sm:$0xff]
  %v57 = vld [vmem:[#allocation2 + $0x20] sm:$0xff]
  %v58 = vld [vmem:[#allocation2 + $0x28] sm:$0xff]
  %v59 = vld [vmem:[#allocation2 + $0x30] sm:$0xff]
  %v60 = vld [vmem:[#allocation2 + $0x38] sm:$0xff]
  %v61 = vld [vmem:[#allocation2 + $0x40] sm:$0xff]
  %v62 = vld [vmem:[#allocation2 + $0x48] sm:$0xff]
  %v63 = vld [vmem:[#allocation2 + $0x50] sm:$0xff]
  %v64 = vld [vmem:[#allocation2 + $0x58] sm:$0xff]
  %v65 = vld [vmem:[#allocation2 + $0x60] sm:$0xff]
  %v66 = vld [vmem:[#allocation2 + $0x68] sm:$0xff]
  %v67 = vld [vmem:[#allocation2 + $0x70] sm:$0xff]
  %v68 = vld [vmem:[#allocation2 + $0x78] sm:$0xff]
  %v69 = vld [vmem:[%s0] sm:$0xf]
  %v70 = vld [vmem:[%s0 + $0x4] sm:$0xf]
  %v71 = vld [vmem:[%s0 + $0x8] sm:$0xf]
  %v72 = vld [vmem:[%s0 + $0xc] sm:$0xf]
  %v73 = vld [vmem:[%s0 + $0x10] sm:$0xf]
  %v74 = vld [vmem:[%s0 + $0x14] sm:$0xf]
  %v75 = vld [vmem:[%s0 + $0x18] sm:$0xf]
  %v76 = vld [vmem:[%s0 + $0x1c] sm:$0xf]
  %v77 = vld [vmem:[%s0 + $0x20] sm:$0xf]
  %v78 = vld [vmem:[%s0 + $0x24] sm:$0xf]
  %v79 = vld [vmem:[%s0 + $0x28] sm:$0xf]
  %v80 = vld [vmem:[%s0 + $0x2c] sm:$0xf]
  %v81 = vld [vmem:[%s0 + $0x30] sm:$0xf]
  %v82 = vld [vmem:[%s0 + $0x34] sm:$0xf]
  %v83 = vld [vmem:[%s0 + $0x38] sm:$0xf]
  %v84 = vld [vmem:[%s0 + $0x3c] sm:$0xf]
  %v85 = vld [vmem:[%s1] sm:$0xf]
  %v86 = vld [vmem:[%s1 + $0x4] sm:$0xf]
  %v87 = vld [vmem:[%s1 + $0x8] sm:$0xf]
  %v88 = vld [vmem:[%s1 + $0xc] sm:$0xf]
  %v89 = vld [vmem:[%s1 + $0x10] sm:$0xf]
  %v90 = vld [vmem:[%s1 + $0x14] sm:$0xf]
  %v91 = vld [vmem:[%s1 + $0x18] sm:$0xf]
  %v92 = vld [vmem:[%s1 + $0x1c] sm:$0xf]
  %v93 = vld [vmem:[%s1 + $0x20] sm:$0xf]
  %v94 = vld [vmem:[%s1 + $0x24] sm:$0xf]
  %v95 = vld [vmem:[%s1 + $0x28] sm:$0xf]
  %v96 = vld [vmem:[%s1 + $0x2c] sm:$0xf]
  %v97 = vld [vmem:[%s1 + $0x30] sm:$0xf]
  %v98 = vld [vmem:[%s1 + $0x34] sm:$0xf]
  %v99 = vld [vmem:[%s1 + $0x38] sm:$0xf]
  %v100 = vld [vmem:[%s1 + $0x3c] sm:$0xf]
  %v117 = vunpack.c.l.b16 %v69
  %v118 = vunpack.c.l.b16 %v70
  %v119 = vunpack.c.l.b16 %v71
  %v120 = vunpack.c.l.b16 %v72
  %v121 = vunpack.c.l.b16 %v73
  %v122 = vunpack.c.l.b16 %v74
  %v123 = vunpack.c.l.b16 %v75
  %v124 = vunpack.c.l.b16 %v76
  %v125 = vunpack.c.l.b16 %v77
  %v126 = vunpack.c.l.b16 %v78
  %v127 = vunpack.c.l.b16 %v79
  %v128 = vunpack.c.l.b16 %v80
  %v129 = vunpack.c.l.b16 %v81
  %v130 = vunpack.c.l.b16 %v82
  %v131 = vunpack.c.l.b16 %v83
  %v132 = vunpack.c.l.b16 %v84
  %v133 = vpack.c.b16 %v118, %v117
  %v134 = vpack.c.b16 %v120, %v119
  %v135 = vpack.c.b16 %v122, %v121
  %v136 = vpack.c.b16 %v124, %v123
  %v137 = vpack.c.b16 %v126, %v125
  %v138 = vpack.c.b16 %v128, %v127
  %v139 = vpack.c.b16 %v130, %v129
  %v140 = vpack.c.b16 %v132, %v131
  %v165 = vunpack.c.l.b16 %v85
  %v166 = vunpack.c.l.b16 %v86
  %v167 = vunpack.c.l.b16 %v87
  %v168 = vunpack.c.l.b16 %v88
  %v169 = vunpack.c.l.b16 %v89
  %v170 = vunpack.c.l.b16 %v90
  %v171 = vunpack.c.l.b16 %v91
  %v172 = vunpack.c.l.b16 %v92
  %v173 = vunpack.c.l.b16 %v93
  %v174 = vunpack.c.l.b16 %v94
  %v175 = vunpack.c.l.b16 %v95
  %v176 = vunpack.c.l.b16 %v96
  %v177 = vunpack.c.l.b16 %v97
  %v178 = vunpack.c.l.b16 %v98
  %v179 = vunpack.c.l.b16 %v99
  %v180 = vunpack.c.l.b16 %v100
  %v181 = vpack.c.b16 %v166, %v165
  %v182 = vpack.c.b16 %v168, %v167
  %v183 = vpack.c.b16 %v170, %v169
  %v184 = vpack.c.b16 %v172, %v171
  %v185 = vpack.c.b16 %v174, %v173
  %v186 = vpack.c.b16 %v176, %v175
  %v187 = vpack.c.b16 %v178, %v177
  %v188 = vpack.c.b16 %v180, %v179
  %197 = vmatprep.subr.bf16.mxu0 0
  %198 = vmatpush1.bf16.msra.mxu0 %v181
  %199 = vmatprep.subr.bf16.mxu0 0
  %200 = vmatpush1.bf16.msra.mxu0 %v182
  %201 = vmatprep.subr.bf16.mxu0 0
  %202 = vmatpush1.bf16.msra.mxu0 %v183
  %203 = vmatprep.subr.bf16.mxu0 0
  %204 = vmatpush1.bf16.msra.mxu0 %v184
  %205 = vmatprep.subr.bf16.mxu0 0
  %206 = vmatpush1.bf16.msra.mxu0 %v185
  %207 = vmatprep.subr.bf16.mxu0 0
  %208 = vmatpush1.bf16.msra.mxu0 %v186
  %209 = vmatprep.subr.bf16.mxu0 0
  %210 = vmatpush1.bf16.msra.mxu0 %v187
  %211 = vmatprep.subr.bf16.mxu0 0
  %212 = vmatpush1.bf16.msra.mxu0 %v188
  %213 = vmatprep.subr.bf16.mxu0 0
  %214 = vmatpush1.bf16.msra.mxu0 0
  %215 = vmatprep.subr.bf16.mxu0 0
  %216 = vmatpush1.bf16.msra.mxu0 0
  %217 = vmatprep.subr.bf16.mxu0 0
  %218 = vmatpush1.bf16.msra.mxu0 0
  %219 = vmatprep.subr.bf16.mxu0 0
  %220 = vmatpush1.bf16.msra.mxu0 0
  %221 = vmatprep.subr.bf16.mxu0 0
  %222 = vmatpush1.bf16.msra.mxu0 0
  %223 = vmatprep.subr.bf16.mxu0 0
  %224 = vmatpush1.bf16.msra.mxu0 0
  %225 = vmatprep.subr.bf16.mxu0 0
  %226 = vmatpush1.bf16.msra.mxu0 0
  %227 = vmatprep.subr.bf16.mxu0 0
  %228 = vmatpush1.bf16.msra.mxu0 0
  %229 = vmatprep.mubr.bf16.mxu0 0
  %230 = vmatmul.mubr.bf16.gmra.mrb[0].mxu0 %v133
  %v231 = vpop.f32.mrb[0].mxu0
  %v232 = vadd.f32 0.0, %v231
  %v233 = vpop.f32.mrb[0].mxu0
  %v234 = vpop.f32.mrb[0].mxu0
  %v235 = vadd.f32 0.0, %v234
  %v236 = vpop.f32.mrb[0].mxu0
  %237 = vmatprep.mubr.bf16.mxu0 0
  %238 = vmatmul.mubr.bf16.gmra.mrb[0].mxu0 %v134
  %v239 = vpop.f32.mrb[0].mxu0
  %v240 = vadd.f32 0.0, %v239
  %v241 = vpop.f32.mrb[0].mxu0
  %v242 = vpop.f32.mrb[0].mxu0
  %v243 = vadd.f32 0.0, %v242
  %v244 = vpop.f32.mrb[0].mxu0
  %245 = vmatprep.mubr.bf16.mxu0 0
  %246 = vmatmul.mubr.bf16.gmra.mrb[0].mxu0 %v135
  %v247 = vpop.f32.mrb[0].mxu0
  %v248 = vadd.f32 0.0, %v247
  %v249 = vpop.f32.mrb[0].mxu0
  %v250 = vpop.f32.mrb[0].mxu0
  %v251 = vadd.f32 0.0, %v250
  %v252 = vpop.f32.mrb[0].mxu0
  %253 = vmatprep.mubr.bf16.mxu0 0
  %254 = vmatmul.mubr.bf16.gmra.mrb[0].mxu0 %v136
  %v255 = vpop.f32.mrb[0].mxu0
  %v256 = vadd.f32 0.0, %v255
  %v257 = vpop.f32.mrb[0].mxu0
  %v258 = vpop.f32.mrb[0].mxu0
  %v259 = vadd.f32 0.0, %v258
  %v260 = vpop.f32.mrb[0].mxu0
  %261 = vmatprep.mubr.bf16.mxu0 0
  %262 = vmatmul.mubr.bf16.gmra.mrb[0].mxu0 %v137
  %v263 = vpop.f32.mrb[0].mxu0
  %v264 = vadd.f32 0.0, %v263
  %v265 = vpop.f32.mrb[0].mxu0
  %v266 = vpop.f32.mrb[0].mxu0
  %v267 = vadd.f32 0.0, %v266
  %v268 = vpop.f32.mrb[0].mxu0
  %269 = vmatprep.mubr.bf16.mxu0 0
  %270 = vmatmul.mubr.bf16.gmra.mrb[0].mxu0 %v138
  %v271 = vpop.f32.mrb[0].mxu0
  %v272 = vadd.f32 0.0, %v271
  %v273 = vpop.f32.mrb[0].mxu0
  %v274 = vpop.f32.mrb[0].mxu0
  %v275 = vadd.f32 0.0, %v274
  %v276 = vpop.f32.mrb[0].mxu0
  %277 = vmatprep.mubr.bf16.mxu0 0
  %278 = vmatmul.mubr.bf16.gmra.mrb[0].mxu0 %v139
  %v279 = vpop.f32.mrb[0].mxu0
  %v280 = vadd.f32 0.0, %v279
  %v281 = vpop.f32.mrb[0].mxu0
  %v282 = vpop.f32.mrb[0].mxu0
  %v283 = vadd.f32 0.0, %v282
  %v284 = vpop.f32.mrb[0].mxu0
  %285 = vmatprep.mubr.bf16.mxu0 0
  %286 = vmatmul.mubr.bf16.gmra.mrb[0].mxu0 %v140
  %v287 = vpop.f32.mrb[0].mxu0
  %v288 = vadd.f32 0.0, %v287
  %v289 = vpop.f32.mrb[0].mxu0
  %v290 = vpop.f32.mrb[0].mxu0
  %v291 = vadd.f32 0.0, %v290
  %v292 = vpop.f32.mrb[0].mxu0
  %293 = vdwg.mxu0
  %v294 = vadd.f32 %v53, %v232
  %v295 = vadd.f32 %v54, %v235
  %v296 = vadd.f32 %v55, %v240
  %v297 = vadd.f32 %v56, %v243
  %v298 = vadd.f32 %v57, %v248
  %v299 = vadd.f32 %v58, %v251
  %v300 = vadd.f32 %v59, %v256
  %v301 = vadd.f32 %v60, %v259
  %v302 = vadd.f32 %v61, %v264
  %v303 = vadd.f32 %v62, %v267
  %v304 = vadd.f32 %v63, %v272
  %v305 = vadd.f32 %v64, %v275
  %v306 = vadd.f32 %v65, %v280
  %v307 = vadd.f32 %v66, %v283
  %v308 = vadd.f32 %v67, %v288
  %v309 = vadd.f32 %v68, %v291
  %310 = vst [vmem:[#allocation2] sm:$0xff] %v294
  %311 = vst [vmem:[#allocation2 + $0x8] sm:$0xff] %v295
  %312 = vst [vmem:[#allocation2 + $0x10] sm:$0xff] %v296
  %313 = vst [vmem:[#allocation2 + $0x18] sm:$0xff] %v297
  %314 = vst [vmem:[#allocation2 + $0x20] sm:$0xff] %v298
  %315 = vst [vmem:[#allocation2 + $0x28] sm:$0xff] %v299
  %316 = vst [vmem:[#allocation2 + $0x30] sm:$0xff] %v300
  %317 = vst [vmem:[#allocation2 + $0x38] sm:$0xff] %v301
  %318 = vst [vmem:[#allocation2 + $0x40] sm:$0xff] %v302
  %319 = vst [vmem:[#allocation2 + $0x48] sm:$0xff] %v303
  %320 = vst [vmem:[#allocation2 + $0x50] sm:$0xff] %v304
  %321 = vst [vmem:[#allocation2 + $0x58] sm:$0xff] %v305
  %322 = vst [vmem:[#allocation2 + $0x60] sm:$0xff] %v306
  %323 = vst [vmem:[#allocation2 + $0x68] sm:$0xff] %v307
  %324 = vst [vmem:[#allocation2 + $0x70] sm:$0xff] %v308
  %325 = vst [vmem:[#allocation2 + $0x78] sm:$0xff] %v309
  // Predicated region
  $region18: #{sage_forward.10} parent=0 // pred_check
    %p326 = pneg %p17
  $region19: #{sage_forward.10} parent=0 // pred_check_branch
    %328 = sbr.rel (%p326) target = $region21
  $region20: #{sage_forward.10} parent=0 // pred_region
    %v329 = vld [vmem:[#allocation2] sm:$0xff]
    %v330 = vld [vmem:[#allocation2 + $0x8] sm:$0xff]
    %v331 = vld [vmem:[#allocation2 + $0x10] sm:$0xff]
    %v332 = vld [vmem:[#allocation2 + $0x18] sm:$0xff]
    %v333 = vld [vmem:[#allocation2 + $0x20] sm:$0xff]
    %v334 = vld [vmem:[#allocation2 + $0x28] sm:$0xff]
    %v335 = vld [vmem:[#allocation2 + $0x30] sm:$0xff]
    %v336 = vld [vmem:[#allocation2 + $0x38] sm:$0xff]
    %v337 = vld [vmem:[#allocation2 + $0x40] sm:$0xff]
    %v338 = vld [vmem:[#allocation2 + $0x48] sm:$0xff]
    %v339 = vld [vmem:[#allocation2 + $0x50] sm:$0xff]
    %v340 = vld [vmem:[#allocation2 + $0x58] sm:$0xff]
    %v341 = vld [vmem:[#allocation2 + $0x60] sm:$0xff]
    %v342 = vld [vmem:[#allocation2 + $0x68] sm:$0xff]
    %v343 = vld [vmem:[#allocation2 + $0x70] sm:$0xff]
    %v344 = vld [vmem:[#allocation2 + $0x78] sm:$0xff]
    %v345 = vpack.c.bf16 %v330, %v329
    %v346 = vpack.c.bf16 %v332, %v331
    %v347 = vpack.c.bf16 %v334, %v333
    %v348 = vpack.c.bf16 %v336, %v335
    %v349 = vpack.c.bf16 %v338, %v337
    %v350 = vpack.c.bf16 %v340, %v339
    %v351 = vpack.c.bf16 %v342, %v341
    %v352 = vpack.c.bf16 %v344, %v343
    %v361 = vunpack.c.l.b16 %v345
    %v362 = vunpack.c.h.b16 %v345
    %v363 = vunpack.c.l.b16 %v346
    %v364 = vunpack.c.h.b16 %v346
    %v365 = vunpack.c.l.b16 %v347
    %v366 = vunpack.c.h.b16 %v347
    %v367 = vunpack.c.l.b16 %v348
    %v368 = vunpack.c.h.b16 %v348
    %v369 = vunpack.c.l.b16 %v349
    %v370 = vunpack.c.h.b16 %v349
    %v371 = vunpack.c.l.b16 %v350
    %v372 = vunpack.c.h.b16 %v350
    %v373 = vunpack.c.l.b16 %v351
    %v374 = vunpack.c.h.b16 %v351
    %v375 = vunpack.c.l.b16 %v352
    %v376 = vunpack.c.h.b16 %v352
    %v377 = vpack.c.b16 %v361, %v361
    %v378 = vpack.c.b16 %v362, %v362
    %v379 = vpack.c.b16 %v363, %v363
    %v380 = vpack.c.b16 %v364, %v364
    %v381 = vpack.c.b16 %v365, %v365
    %v382 = vpack.c.b16 %v366, %v366
    %v383 = vpack.c.b16 %v367, %v367
    %v384 = vpack.c.b16 %v368, %v368
    %v385 = vpack.c.b16 %v369, %v369
    %v386 = vpack.c.b16 %v370, %v370
    %v387 = vpack.c.b16 %v371, %v371
    %v388 = vpack.c.b16 %v372, %v372
    %v389 = vpack.c.b16 %v373, %v373
    %v390 = vpack.c.b16 %v374, %v374
    %v391 = vpack.c.b16 %v375, %v375
    %v392 = vpack.c.b16 %v376, %v376
    %409 = vst [vmem:[%s4] sm:$0xf] %v377
    %410 = vst [vmem:[%s4 + $0x4] sm:$0xf] %v378
    %411 = vst [vmem:[%s4 + $0x8] sm:$0xf] %v379
    %412 = vst [vmem:[%s4 + $0xc] sm:$0xf] %v380
    %413 = vst [vmem:[%s4 + $0x10] sm:$0xf] %v381
    %414 = vst [vmem:[%s4 + $0x14] sm:$0xf] %v382
    %415 = vst [vmem:[%s4 + $0x18] sm:$0xf] %v383
    %416 = vst [vmem:[%s4 + $0x1c] sm:$0xf] %v384
    %417 = vst [vmem:[%s4 + $0x20] sm:$0xf] %v385
    %418 = vst [vmem:[%s4 + $0x24] sm:$0xf] %v386
    %419 = vst [vmem:[%s4 + $0x28] sm:$0xf] %v387
    %420 = vst [vmem:[%s4 + $0x2c] sm:$0xf] %v388
    %421 = vst [vmem:[%s4 + $0x30] sm:$0xf] %v389
    %422 = vst [vmem:[%s4 + $0x34] sm:$0xf] %v390
    %423 = vst [vmem:[%s4 + $0x38] sm:$0xf] %v391
    %424 = vst [vmem:[%s4 + $0x3c] sm:$0xf] %v392
    %v425 = vmax.f32 %v329, 0.0
    %v426 = vmax.f32 %v330, 0.0
    %v427 = vmax.f32 %v331, 0.0
    %v428 = vmax.f32 %v332, 0.0
    %v429 = vmax.f32 %v333, 0.0
    %v430 = vmax.f32 %v334, 0.0
    %v431 = vmax.f32 %v335, 0.0
    %v432 = vmax.f32 %v336, 0.0
    %v433 = vmax.f32 %v337, 0.0
    %v434 = vmax.f32 %v338, 0.0
    %v435 = vmax.f32 %v339, 0.0
    %v436 = vmax.f32 %v340, 0.0
    %v437 = vmax.f32 %v341, 0.0
    %v438 = vmax.f32 %v342, 0.0
    %v439 = vmax.f32 %v343, 0.0
    %v440 = vmax.f32 %v344, 0.0
    %v441 = vpack.c.bf16 %v426, %v425
    %v442 = vpack.c.bf16 %v428, %v427
    %v443 = vpack.c.bf16 %v430, %v429
    %v444 = vpack.c.bf16 %v432, %v431
    %v445 = vpack.c.bf16 %v434, %v433
    %v446 = vpack.c.bf16 %v436, %v435
    %v447 = vpack.c.bf16 %v438, %v437
    %v448 = vpack.c.bf16 %v440, %v439
    %v457 = vunpack.c.l.b16 %v441
    %v458 = vunpack.c.h.b16 %v441
    %v459 = vunpack.c.l.b16 %v442
    %v460 = vunpack.c.h.b16 %v442
    %v461 = vunpack.c.l.b16 %v443
    %v462 = vunpack.c.h.b16 %v443
    %v463 = vunpack.c.l.b16 %v444
    %v464 = vunpack.c.h.b16 %v444
    %v465 = vunpack.c.l.b16 %v445
    %v466 = vunpack.c.h.b16 %v445
    %v467 = vunpack.c.l.b16 %v446
    %v468 = vunpack.c.h.b16 %v446
    %v469 = vunpack.c.l.b16 %v447
    %v470 = vunpack.c.h.b16 %v447
    %v471 = vunpack.c.l.b16 %v448
    %v472 = vunpack.c.h.b16 %v448
    %v473 = vpack.c.b16 %v457, %v457
    %v474 = vpack.c.b16 %v458, %v458
    %v475 = vpack.c.b16 %v459, %v459
    %v476 = vpack.c.b16 %v460, %v460
    %v477 = vpack.c.b16 %v461, %v461
    %v478 = vpack.c.b16 %v462, %v462
    %v479 = vpack.c.b16 %v463, %v463
    %v480 = vpack.c.b16 %v464, %v464
    %v481 = vpack.c.b16 %v465, %v465
    %v482 = vpack.c.b16 %v466, %v466
    %v483 = vpack.c.b16 %v467, %v467
    %v484 = vpack.c.b16 %v468, %v468
    %v485 = vpack.c.b16 %v469, %v469
    %v486 = vpack.c.b16 %v470, %v470
    %v487 = vpack.c.b16 %v471, %v471
    %v488 = vpack.c.b16 %v472, %v472
    %505 = vst [vmem:[%s3] sm:$0xf] %v473
    %506 = vst [vmem:[%s3 + $0x4] sm:$0xf] %v474
    %507 = vst [vmem:[%s3 + $0x8] sm:$0xf] %v475
    %508 = vst [vmem:[%s3 + $0xc] sm:$0xf] %v476
    %509 = vst [vmem:[%s3 + $0x10] sm:$0xf] %v477
    %510 = vst [vmem:[%s3 + $0x14] sm:$0xf] %v478
    %511 = vst [vmem:[%s3 + $0x18] sm:$0xf] %v479
    %512 = vst [vmem:[%s3 + $0x1c] sm:$0xf] %v480
    %513 = vst [vmem:[%s3 + $0x20] sm:$0xf] %v481
    %514 = vst [vmem:[%s3 + $0x24] sm:$0xf] %v482
    %515 = vst [vmem:[%s3 + $0x28] sm:$0xf] %v483
    %516 = vst [vmem:[%s3 + $0x2c] sm:$0xf] %v484
    %517 = vst [vmem:[%s3 + $0x30] sm:$0xf] %v485
    %518 = vst [vmem:[%s3 + $0x34] sm:$0xf] %v486
    %519 = vst [vmem:[%s3 + $0x38] sm:$0xf] %v487
    %520 = vst [vmem:[%s3 + $0x3c] sm:$0xf] %v488
  $region21: #{sage_forward.10} parent=0 // pred_fallthru
    _
  // Predicated region
  $region22: #{sage_forward.10} parent=0 // pred_check
    _
  $region23: #{sage_forward.10} parent=0 // pred_check_branch
    %522 = sbr.rel (0) target = $region25
  $region24: #{sage_forward.10} parent=0 // pred_region
    _
  $region25: #{sage_forward.10} parent=0 // pred_fallthru
    _
  // Predicated region
  $region26: #{sage_forward.10} parent=0 // pred_check
    _
  $region27: #{sage_forward.10} parent=0 // pred_check_branch
    %524 = sbr.rel (0) target = $region29
  $region28: #{sage_forward.10} parent=0 // pred_region
    _
  $region29: #{sage_forward.10} parent=0 // pred_fallthru
    _
  // Predicated region
  $region30: #{sage_forward.10} parent=0 // pred_check
    _
  $region31: #{sage_forward.10} parent=0 // pred_check_branch
    %526 = sbr.rel (0) target = $region33
  $region32: #{sage_forward.10} parent=0 // pred_region
    _
  $region33: #{sage_forward.10} parent=0 // pred_fallthru
    _
  // Predicated region
  $region34: #{sage_forward.10} parent=0 // pred_check
    _
  $region35: #{sage_forward.10} parent=0 // pred_check_branch
    %528 = sbr.rel (0) target = $region37
  $region36: #{sage_forward.10} parent=0 // pred_region
    _
  $region37: #{sage_forward.10} parent=0 // pred_fallthru
    _

// kernel: sage_forward.11
$region0: #{sage_forward.11}
  #allocation0 [shape = 'u32[]', space=smem, size = 0x4, offset = 0x4, fixed_abs, tag = 'smem constant byte address 0x4 - core index']
  #allocation1 [shape = 'u32[144,128]{1,0:T(1,128)}', space=vmem, size = 0x12000, scoped, tag = 'internal scratch']
  %s0 = inlined_call_operand.vmem [shape: bf16[16,128], index: 0, kind: input, shape index: {}]
  %s1 = inlined_call_operand.vmem [shape: bf16[128,128], index: 1, kind: input, shape index: {}]
  %s2 = inlined_call_operand.vmem [shape: f32[16,128], index: 2, kind: output, shape index: {}]
  %s3 = sld [smem:[#allocation0]]
  $region22: #{sage_forward.11} parent=0
    _
  %s5 = ssub.s32 1, %s3
  %s6 = scalar_select 0, %s5, %s3
  // Predicated region
  $region2: #{sage_forward.11} parent=0 // pred_check
    _
  $region3: #{sage_forward.11} parent=0 // pred_check_branch
    %8 = sbr.rel (0) target = $region5
  $region4: #{sage_forward.11} parent=0 // pred_region
    _
  $region5: #{sage_forward.11} parent=0 // pred_fallthru
    _
  // Predicated region
  $region6: #{sage_forward.11} parent=0 // pred_check
    _
  $region7: #{sage_forward.11} parent=0 // pred_check_branch
    %10 = sbr.rel (0) target = $region9
  $region8: #{sage_forward.11} parent=0 // pred_region
    _
  $region9: #{sage_forward.11} parent=0 // pred_fallthru
    _
  %p12 = scmp.eq.s32.totalorder 0, 0
  // Predicated region
  $region10: #{sage_forward.11} parent=0 // pred_check
    %p13 = pneg %p12
  $region11: #{sage_forward.11} parent=0 // pred_check_branch
    %15 = sbr.rel (%p13) target = $region13
  $region12: #{sage_forward.11} parent=0 // pred_region
    %16 = vst [vmem:[%s2] sm:$0xff] 0.0
    %17 = vst [vmem:[%s2 + $0x8] sm:$0xff] 0.0
  $region13: #{sage_forward.11} parent=0 // pred_fallthru
    _
  %v18 = vld [vmem:[%s2] sm:$0xff]
  %v19 = vld [vmem:[%s2 + $0x8] sm:$0xff]
  %v20 = vld [vmem:[%s0] sm:$0xf]
  %v21 = vld [vmem:[%s0 + $0x4] sm:$0xf]
  %v22 = vld [vmem:[%s1] sm:$0xf]
  %v23 = vld [vmem:[%s1 + $0x4] sm:$0xf]
  %v24 = vld [vmem:[%s1 + $0x8] sm:$0xf]
  %v25 = vld [vmem:[%s1 + $0xc] sm:$0xf]
  %v26 = vld [vmem:[%s1 + $0x10] sm:$0xf]
  %v27 = vld [vmem:[%s1 + $0x14] sm:$0xf]
  %v28 = vld [vmem:[%s1 + $0x18] sm:$0xf]
  %v29 = vld [vmem:[%s1 + $0x1c] sm:$0xf]
  %v30 = vld [vmem:[%s1 + $0x20] sm:$0xf]
  %v31 = vld [vmem:[%s1 + $0x24] sm:$0xf]
  %v32 = vld [vmem:[%s1 + $0x28] sm:$0xf]
  %v33 = vld [vmem:[%s1 + $0x2c] sm:$0xf]
  %v34 = vld [vmem:[%s1 + $0x30] sm:$0xf]
  %v35 = vld [vmem:[%s1 + $0x34] sm:$0xf]
  %v36 = vld [vmem:[%s1 + $0x38] sm:$0xf]
  %v37 = vld [vmem:[%s1 + $0x3c] sm:$0xf]
  %v40 = vunpack.c.l.b16 %v20
  %v41 = vunpack.c.l.b16 %v21
  %v42 = vpack.c.b16 %v41, %v40
  %v60 = vunpack.c.l.b16 %v22
  %v61 = vunpack.c.l.b16 %v23
  %v62 = vunpack.c.l.b16 %v24
  %v63 = vunpack.c.l.b16 %v25
  %v64 = vunpack.c.l.b16 %v26
  %v65 = vunpack.c.l.b16 %v27
  %v66 = vunpack.c.l.b16 %v28
  %v67 = vunpack.c.l.b16 %v29
  %v68 = vunpack.c.l.b16 %v30
  %v69 = vunpack.c.l.b16 %v31
  %v70 = vunpack.c.l.b16 %v32
  %v71 = vunpack.c.l.b16 %v33
  %v72 = vunpack.c.l.b16 %v34
  %v73 = vunpack.c.l.b16 %v35
  %v74 = vunpack.c.l.b16 %v36
  %v75 = vunpack.c.l.b16 %v37
  %v76 = vpack.c.b16 %v61, %v60
  %v77 = vpack.c.b16 %v63, %v62
  %v78 = vpack.c.b16 %v65, %v64
  %v79 = vpack.c.b16 %v67, %v66
  %v80 = vpack.c.b16 %v69, %v68
  %v81 = vpack.c.b16 %v71, %v70
  %v82 = vpack.c.b16 %v73, %v72
  %v83 = vpack.c.b16 %v75, %v74
  %92 = vmatprep.subr.bf16.mxu0 0
  %93 = vmatpush1.bf16.msra.mxu0 %v76
  %94 = vmatprep.subr.bf16.mxu0 0
  %95 = vmatpush1.bf16.msra.mxu0 %v77
  %96 = vmatprep.subr.bf16.mxu0 0
  %97 = vmatpush1.bf16.msra.mxu0 %v78
  %98 = vmatprep.subr.bf16.mxu0 0
  %99 = vmatpush1.bf16.msra.mxu0 %v79
  %100 = vmatprep.subr.bf16.mxu0 0
  %101 = vmatpush1.bf16.msra.mxu0 %v80
  %102 = vmatprep.subr.bf16.mxu0 0
  %103 = vmatpush1.bf16.msra.mxu0 %v81
  %104 = vmatprep.subr.bf16.mxu0 0
  %105 = vmatpush1.bf16.msra.mxu0 %v82
  %106 = vmatprep.subr.bf16.mxu0 0
  %107 = vmatpush1.bf16.msra.mxu0 %v83
  %108 = vmatprep.subr.bf16.mxu0 0
  %109 = vmatpush1.bf16.msra.mxu0 0
  %110 = vmatprep.subr.bf16.mxu0 0
  %111 = vmatpush1.bf16.msra.mxu0 0
  %112 = vmatprep.subr.bf16.mxu0 0
  %113 = vmatpush1.bf16.msra.mxu0 0
  %114 = vmatprep.subr.bf16.mxu0 0
  %115 = vmatpush1.bf16.msra.mxu0 0
  %116 = vmatprep.subr.bf16.mxu0 0
  %117 = vmatpush1.bf16.msra.mxu0 0
  %118 = vmatprep.subr.bf16.mxu0 0
  %119 = vmatpush1.bf16.msra.mxu0 0
  %120 = vmatprep.subr.bf16.mxu0 0
  %121 = vmatpush1.bf16.msra.mxu0 0
  %122 = vmatprep.subr.bf16.mxu0 0
  %123 = vmatpush1.bf16.msra.mxu0 0
  %124 = vmatprep.mubr.bf16.mxu0 0
  %125 = vmatmul.mubr.bf16.gmra.mrb[0].mxu0 %v42
  %v126 = vpop.f32.mrb[0].mxu0
  %v127 = vadd.f32 0.0, %v126
  %v128 = vpop.f32.mrb[0].mxu0
  %v129 = vpop.f32.mrb[0].mxu0
  %v130 = vadd.f32 0.0, %v129
  %v131 = vpop.f32.mrb[0].mxu0
  %132 = vdwg.mxu0
  %v133 = vadd.f32 %v18, %v127
  %v134 = vadd.f32 %v19, %v130
  %135 = vst [vmem:[%s2] sm:$0xff] %v133
  %136 = vst [vmem:[%s2 + $0x8] sm:$0xff] %v134
  // Predicated region
  $region14: #{sage_forward.11} parent=0 // pred_check
    _
  $region15: #{sage_forward.11} parent=0 // pred_check_branch
    %138 = sbr.rel (0) target = $region17
  $region16: #{sage_forward.11} parent=0 // pred_region
    _
  $region17: #{sage_forward.11} parent=0 // pred_fallthru
    _
  // Predicated region
  $region18: #{sage_forward.11} parent=0 // pred_check
    _
  $region19: #{sage_forward.11} parent=0 // pred_check_branch
    %140 = sbr.rel (0) target = $region21
  $region20: #{sage_forward.11} parent=0 // pred_region
    _
  $region21: #{sage_forward.11} parent=0 // pred_fallthru
    _

</llo_original>
